<compile_context>
chip_gen: v7x
topology: tpu7x:2x2x1
jax: 0.10.0
libtpu: 0.0.40
codegen_flags: <defaults>
</compile_context>

<pallas_src>
import functools

import numpy as np

import jax
import jax.numpy as jnp
from jax.experimental import pallas as pl
from jax.experimental.pallas import tpu as pltpu


def _round_up(x, m):
    return ((x + m - 1) // m) * m


def _cdiv(a, b):
    return (a + b - 1) // b


def _pair(v):
    if isinstance(v, (tuple, list)):
        assert len(v) == 2
        return int(v[0]), int(v[1])
    return int(v), int(v)


# ----------------------------------------------------------------------------
# Kernel: wide-output tap conv.
#   o[co, q] = relu(b[co] + sum_{kh,kw,ci} w[kh*KW+kw, co, ci] *
#                                x[ci, base + q + kh*PITCH + kw])
# ----------------------------------------------------------------------------
def _conv_tap_kernel(x_ref, w_ref, b_ref, o_ref, *, KH, KW, PITCH, LBLK, R):
    # x_ref: (1, Cin, Ltot)        bf16/f32  flattened padded plane (row pitch PITCH)
    # w_ref: (KH*KW, Cout, Cin)    f32       per-tap weight matrices
    # b_ref: (Cout, 1)             f32
    # o_ref: (1, Cout, LBLK)                 lane-dense 128-aligned wide-output block
    WIN = LBLK + 128                 # +128 lanes of slack so kw-rolls never wrap into kept lanes
    cout = w_ref.shape[1]
    base = 0 if R == 1 else pl.multiple_of(pl.program_id(1) * LBLK, 128)

    acc = jnp.zeros((cout, WIN), jnp.float32)
    for kh in range(KH):             # static unroll: KH window loads, KH*KW small MXU matmuls
        # One (narrow-dtype) vector load per kh; widened in-register.
        win = x_ref[0, :, pl.ds(base + kh * PITCH, WIN)].astype(jnp.float32)
        for kw in range(KW):
            # Column shift on the XLU (roll) instead of another unaligned load.
            # Wrapped lanes land only in the discarded [LBLK, WIN) tail.
            tap = win if kw == 0 else pltpu.roll(win, shift=WIN - kw, axis=1)
            acc = acc + jnp.dot(w_ref[kh * KW + kw], tap,
                                preferred_element_type=jnp.float32)
    out = jnp.maximum(acc[:, :LBLK] + b_ref[...], 0.0)   # bias broadcast over lanes, then ReLU
    o_ref[0] = out.astype(o_ref.dtype)


# ----------------------------------------------------------------------------
# Tiling / VMEM helpers.
# ----------------------------------------------------------------------------
def _pick_block(lwide, n_images):
    """Split the per-image wide output (lwide lanes) into 128-aligned blocks."""
    lout = _round_up(lwide, 128)
    lblk = _round_up(min(lout, 8 * 1024), 128)   # big blocks: ~0.35us fixed cost per grid step
    # For small batches make sure there are enough grid steps to pipeline the
    # input DMA and feed both TensorCores, but never drop below ~1 KiLane per
    # step where fixed per-step overhead starts to dominate.
    while lblk > 1024 and n_images * _cdiv(lout, lblk) < 8:
        lblk = _round_up(lblk // 2, 128)
    return lblk, _cdiv(lout, lblk)


def _phys_tile_bytes(rows, cols, dtype):
    """VMEM footprint of a (rows, cols) tile including sublane/lane padding."""
    itemsize = np.dtype(dtype).itemsize
    sub = 8 * (4 // itemsize)                    # 8 rows f32, 16 rows bf16, 32 rows i8
    return _round_up(max(rows, 1), sub) * _round_up(max(cols, 1), 128) * itemsize


def _vmem_limit_bytes(cin, ltot, cout, lblk, ntaps, in_dtype, out_dtype):
    need = 2 * _phys_tile_bytes(cin, ltot, in_dtype)            # double-buffered image plane
    need += 2 * _phys_tile_bytes(cout, lblk, out_dtype)         # double-buffered output block
    need += 2 * ntaps * _phys_tile_bytes(cout, cin, jnp.float32)  # resident weights
    need += 2 * _phys_tile_bytes(cout, 1, jnp.float32)          # resident bias
    need += _phys_tile_bytes(cout, lblk + 128, jnp.float32)     # f32 accumulator headroom
    need += 2 * 1024 * 1024                                     # misc slack
    try:
        cap = int(getattr(pltpu.get_tpu_info(), "vmem_capacity_bytes",
                          64 * 1024 * 1024))
    except Exception:
        cap = 64 * 1024 * 1024                                  # conservative (v7x-sized)
    # 32 MiB is the safe floor on v7x (64 MiB physical); only ask for more when
    # the resident image actually needs it, and never more than 3/4 of VMEM.
    return int(min(max(need, 32 * 1024 * 1024), cap * 3 // 4))


# ----------------------------------------------------------------------------
# Public entry point (matches ConvBlock.forward: Conv2d + ReLU, NCHW).
# ----------------------------------------------------------------------------
def conv_block_forward(x, weight, bias, stride=1, padding=0, *,
                       compute_dtype=jnp.bfloat16, out_dtype=jnp.float32):
    """Conv2d(stride, padding) + ReLU.

    x: (N, Cin, H, W) f32; weight: (Cout, Cin, KH, KW); bias: (Cout,).
    NOTE: the image/weights are rounded to `compute_dtype` (bf16 by default,
    halving the streamed HBM/VMEM traffic) with f32 accumulation; pass
    compute_dtype=jnp.float32 for bit-level parity with an f32 PyTorch module.
    `out_dtype` defaults to f32 to match the module; bf16 halves the writeback.
    """
    N, Cin, H, W = x.shape
    Cout, _, KH, KW = weight.shape
    sh, sw = _pair(stride)
    ph, pw = _pair(padding)
    OH = (H + 2 * ph - KH) // sh + 1
    OW = (W + 2 * pw - KW) // sw + 1

    # ---- Rewrite stride>1 as a stride-1 conv: fold the sh*sw pixel phases into
    # ---- channels (space-to-depth).  This replaces the old im2col path.
    if sh == 1 and sw == 1:
        Cin2, KH2, KW2 = Cin, KH, KW
        Ws = W + 2 * pw                           # row pitch of the flattened plane
    else:
        Cin2 = Cin * sh * sw
        KH2, KW2 = _cdiv(KH, sh), _cdiv(KW, sw)
        Ws = _cdiv(W + 2 * pw, sw)

    # ---- Wide-output geometry (junk columns >= OW are cropped once in glue).
    lwide = OH * Ws
    Lblk, R = _pick_block(lwide, N)
    Lout = R * Lblk
    WIN = Lblk + 128
    ltot_needed = (R - 1) * Lblk + (KH2 - 1) * Ws + WIN   # last kh-window must stay in bounds
    rows_tot = _cdiv(ltot_needed, Ws)
    Ltot = rows_tot * Ws

    # ---- Host prologue: ONE fused pad(+phase fold)+cast -> (N, Cin2, Ltot).
    if sh == 1 and sw == 1:
        xflat = jnp.pad(
            x, ((0, 0), (0, 0), (ph, rows_tot - H - ph), (pw, pw))
        ).astype(compute_dtype).reshape(N, Cin2, Ltot)
        w2 = weight
    else:
        Hpad, Wpad = rows_tot * sh, Ws * sw
        xp = jnp.pad(x, ((0, 0), (0, 0), (ph, Hpad - H - ph), (pw, Wpad - W - pw)))
        xflat = (
            xp.reshape(N, Cin, rows_tot, sh, Ws, sw)
            .transpose(0, 1, 3, 5, 2, 4)          # (N, Cin, phase_h, phase_w, row, col)
            .astype(compute_dtype)
            .reshape(N, Cin2, Ltot)
        )
        wpad = jnp.pad(weight, ((0, 0), (0, 0), (0, KH2 * sh - KH), (0, KW2 * sw - KW)))
        w2 = (
            wpad.reshape(Cout, Cin, KH2, sh, KW2, sw)
            .transpose(0, 1, 3, 5, 2, 4)
            .reshape(Cout, Cin2, KH2, KW2)
        )

    # Per-tap weight matrices, tap-major (kh, kw): (KH2*KW2, Cout, Cin2).
    # Rounded to compute_dtype (to match the streamed image) but held in f32
    # for the in-kernel f32 matmuls.
    w_taps = (jnp.transpose(w2, (2, 3, 0, 1))
              .reshape(KH2 * KW2, Cout, Cin2)
              .astype(compute_dtype).astype(jnp.float32))
    b_col = bias.reshape(Cout, 1).astype(jnp.float32)

    kernel = functools.partial(_conv_tap_kernel, KH=KH2, KW=KW2,
                               PITCH=Ws, LBLK=Lblk, R=R)
    vmem_limit = _vmem_limit_bytes(Cin2, Ltot, Cout, Lblk, KH2 * KW2,
                                   compute_dtype, out_dtype)

    out = pl.pallas_call(
        kernel,
        out_shape=jax.ShapeDtypeStruct((N, Cout, Lout), out_dtype),
        grid_spec=pltpu.PrefetchScalarGridSpec(
            num_scalar_prefetch=0,
            grid=(N, R),
            in_specs=[
                # Whole flattened image: constant in r -> DMA'd once per image,
                # stays resident across its row tiles.
                pl.BlockSpec((1, Cin2, Ltot), lambda n, r: (n, 0, 0)),
                # Tiny weight/bias: constant index -> resident for the whole grid.
                pl.BlockSpec((KH2 * KW2, Cout, Cin2), lambda n, r: (0, 0, 0)),
                pl.BlockSpec((Cout, 1), lambda n, r: (0, 0)),
            ],
            out_specs=pl.BlockSpec((1, Cout, Lblk), lambda n, r: (n, 0, r)),
        ),
        compiler_params=pltpu.CompilerParams(
            dimension_semantics=("parallel", "parallel"),
            vmem_limit_bytes=vmem_limit,
        ),
    )(xflat, w_taps, b_col)

    # ---- Epilogue: single crop of the wide rows back to compact (N, Cout, OH, OW).
    # (A consumer that accepts the wide layout can skip this output-sized pass.)
    return out[:, :, :OH * Ws].reshape(N, Cout, OH, Ws)[:, :, :, :OW]


if __name__ == "__main__":
    # ConvBlock(in_channels=4, out_channels=8, kernel_size=3, stride, padding=1)
    N, Cin, H, W = 2, 4, 16, 16
    Cout, KS = 8, 3

    key = jax.random.PRNGKey(0)
    kx, kw_, kb = jax.random.split(key, 3)
    x = jax.random.normal(kx, (N, Cin, H, W), dtype=jnp.float32)

    # PyTorch-style init: U(-1/sqrt(fan_in), 1/sqrt(fan_in))
    fan_in = Cin * KS * KS
    bound = 1.0 / (fan_in ** 0.5)
    weight = jax.random.uniform(kw_, (Cout, Cin, KS, KS), jnp.float32, -bound, bound)
    bias = jax.random.uniform(kb, (Cout,), jnp.float32, -bound, bound)

    def reference(xv, wv, bv, s, p):
        # Same bf16 rounding of the operands as the kernel path (f32 accumulation).
        xr = xv.astype(jnp.bfloat16).astype(jnp.float32)
        wr = wv.astype(jnp.bfloat16).astype(jnp.float32)
        out = jax.lax.conv_general_dilated(
            xr, wr, window_strides=(s, s),
            padding=((p, p), (p, p)),
            dimension_numbers=("NCHW", "OIHW", "NCHW"))
        return jnp.maximum(out + bv.reshape(1, -1, 1, 1), 0.0)

    # stride=1 (direct path)
    y1 = jax.block_until_ready(conv_block_forward(x, weight, bias, 1, 1))
    r1 = reference(x, weight, bias, 1, 1)
    assert y1.shape == (N, Cout, H, W), y1.shape
    assert jnp.allclose(y1, r1, atol=2e-3, rtol=2e-3), \
        float(jnp.max(jnp.abs(y1 - r1)))

    # stride=2 exercises the space-to-depth rewrite (same kernel).
    y2 = jax.block_until_ready(conv_block_forward(x, weight, bias, 2, 1))
    r2 = reference(x, weight, bias, 2, 1)
    assert y2.shape == r2.shape, (y2.shape, r2.shape)
    assert jnp.allclose(y2, r2, atol=2e-3, rtol=2e-3), \
        float(jnp.max(jnp.abs(y2 - r2)))

    print("KERNEL_OK")
</pallas_src>

<mosaic_0001>
module attributes {stable_mosaic.version = 11 : i64} {
  func.func @_conv_tap_kernel(%arg0: i32, %arg1: i32, %arg2: memref<1x4x558xbf16, #tpu.memory_space<vmem>>, %arg3: memref<9x8x4xf32, #tpu.memory_space<vmem>>, %arg4: memref<8x1xf32, #tpu.memory_space<vmem>>, %arg5: memref<1x8x384xf32, #tpu.memory_space<vmem>>) attributes {dimension_semantics = [#tpu.dimension_semantics<parallel>, #tpu.dimension_semantics<parallel>], iteration_bounds = array<i64: 2, 1>, scalar_prefetch = 0 : i64, scratch_operands = 0 : i64, tpu.core_type = #tpu.core_type<tc>, window_params = [{transform_indices = @transform_0, window_bounds = array<i64: 1, 4, 558>}, {pipeline_mode = #tpu.pipeline_mode<synchronous>, transform_indices = @transform_1, window_bounds = array<i64: 9, 8, 4>}, {pipeline_mode = #tpu.pipeline_mode<synchronous>, transform_indices = @transform_2, window_bounds = array<i64: 8, 1>}, {transform_indices = @transform_3, window_bounds = array<i64: 1, 8, 384>}]} {
    %cst = arith.constant 0.000000e+00 : f32
    %0 = vector.broadcast %cst : f32 to vector<8x512xf32>
    %c0 = arith.constant 0 : index
    %c0_0 = arith.constant 0 : index
    %c0_1 = arith.constant 0 : index
    %1 = vector.load %arg2[%c0, %c0_0, %c0_1] : memref<1x4x558xbf16, #tpu.memory_space<vmem>>, vector<1x4x512xbf16>
    %2 = vector.shape_cast %1 : vector<1x4x512xbf16> to vector<4x512xbf16>
    %3 = arith.extf %2 : vector<4x512xbf16> to vector<4x512xf32>
    %c0_2 = arith.constant 0 : index
    %c0_3 = arith.constant 0 : index
    %c0_4 = arith.constant 0 : index
    %4 = vector.load %arg3[%c0_2, %c0_3, %c0_4] : memref<9x8x4xf32, #tpu.memory_space<vmem>>, vector<1x8x4xf32>
    %5 = vector.shape_cast %4 : vector<1x8x4xf32> to vector<8x4xf32>
    %cst_5 = arith.constant dense<0.000000e+00> : vector<8x512xf32>
    %6 = tpu.matmul %5, %3, %cst_5 {dimension_numbers = #tpu.dot_dimension_numbers<[1], [0], [0], [1], [0, 0, 1, 1], [], []>} : vector<8x4xf32>, vector<4x512xf32>, vector<8x512xf32> -> vector<8x512xf32>
    %7 = arith.addf %0, %6 : vector<8x512xf32>
    %c511_i32 = arith.constant 511 : i32
    %8 = tpu.dynamic_rotate %3 by %c511_i32 dim 1 : vector<4x512xf32>, i32 -> vector<4x512xf32>
    %c1 = arith.constant 1 : index
    %c0_6 = arith.constant 0 : index
    %c0_7 = arith.constant 0 : index
    %9 = vector.load %arg3[%c1, %c0_6, %c0_7] : memref<9x8x4xf32, #tpu.memory_space<vmem>>, vector<1x8x4xf32>
    %10 = vector.shape_cast %9 : vector<1x8x4xf32> to vector<8x4xf32>
    %cst_8 = arith.constant dense<0.000000e+00> : vector<8x512xf32>
    %11 = tpu.matmul %10, %8, %cst_8 {dimension_numbers = #tpu.dot_dimension_numbers<[1], [0], [0], [1], [0, 0, 1, 1], [], []>} : vector<8x4xf32>, vector<4x512xf32>, vector<8x512xf32> -> vector<8x512xf32>
    %12 = arith.addf %7, %11 : vector<8x512xf32>
    %c510_i32 = arith.constant 510 : i32
    %13 = tpu.dynamic_rotate %3 by %c510_i32 dim 1 : vector<4x512xf32>, i32 -> vector<4x512xf32>
    %c2 = arith.constant 2 : index
    %c0_9 = arith.constant 0 : index
    %c0_10 = arith.constant 0 : index
    %14 = vector.load %arg3[%c2, %c0_9, %c0_10] : memref<9x8x4xf32, #tpu.memory_space<vmem>>, vector<1x8x4xf32>
    %15 = vector.shape_cast %14 : vector<1x8x4xf32> to vector<8x4xf32>
    %cst_11 = arith.constant dense<0.000000e+00> : vector<8x512xf32>
    %16 = tpu.matmul %15, %13, %cst_11 {dimension_numbers = #tpu.dot_dimension_numbers<[1], [0], [0], [1], [0, 0, 1, 1], [], []>} : vector<8x4xf32>, vector<4x512xf32>, vector<8x512xf32> -> vector<8x512xf32>
    %17 = arith.addf %12, %16 : vector<8x512xf32>
    %c0_12 = arith.constant 0 : index
    %c0_13 = arith.constant 0 : index
    %c18 = arith.constant 18 : index
    %18 = vector.load %arg2[%c0_12, %c0_13, %c18] : memref<1x4x558xbf16, #tpu.memory_space<vmem>>, vector<1x4x512xbf16>
    %19 = vector.shape_cast %18 : vector<1x4x512xbf16> to vector<4x512xbf16>
    %20 = arith.extf %19 : vector<4x512xbf16> to vector<4x512xf32>
    %c3 = arith.constant 3 : index
    %c0_14 = arith.constant 0 : index
    %c0_15 = arith.constant 0 : index
    %21 = vector.load %arg3[%c3, %c0_14, %c0_15] : memref<9x8x4xf32, #tpu.memory_space<vmem>>, vector<1x8x4xf32>
    %22 = vector.shape_cast %21 : vector<1x8x4xf32> to vector<8x4xf32>
    %cst_16 = arith.constant dense<0.000000e+00> : vector<8x512xf32>
    %23 = tpu.matmul %22, %20, %cst_16 {dimension_numbers = #tpu.dot_dimension_numbers<[1], [0], [0], [1], [0, 0, 1, 1], [], []>} : vector<8x4xf32>, vector<4x512xf32>, vector<8x512xf32> -> vector<8x512xf32>
    %24 = arith.addf %17, %23 : vector<8x512xf32>
    %c511_i32_17 = arith.constant 511 : i32
    %25 = tpu.dynamic_rotate %20 by %c511_i32_17 dim 1 : vector<4x512xf32>, i32 -> vector<4x512xf32>
    %c4 = arith.constant 4 : index
    %c0_18 = arith.constant 0 : index
    %c0_19 = arith.constant 0 : index
    %26 = vector.load %arg3[%c4, %c0_18, %c0_19] : memref<9x8x4xf32, #tpu.memory_space<vmem>>, vector<1x8x4xf32>
    %27 = vector.shape_cast %26 : vector<1x8x4xf32> to vector<8x4xf32>
    %cst_20 = arith.constant dense<0.000000e+00> : vector<8x512xf32>
    %28 = tpu.matmul %27, %25, %cst_20 {dimension_numbers = #tpu.dot_dimension_numbers<[1], [0], [0], [1], [0, 0, 1, 1], [], []>} : vector<8x4xf32>, vector<4x512xf32>, vector<8x512xf32> -> vector<8x512xf32>
    %29 = arith.addf %24, %28 : vector<8x512xf32>
    %c510_i32_21 = arith.constant 510 : i32
    %30 = tpu.dynamic_rotate %20 by %c510_i32_21 dim 1 : vector<4x512xf32>, i32 -> vector<4x512xf32>
    %c5 = arith.constant 5 : index
    %c0_22 = arith.constant 0 : index
    %c0_23 = arith.constant 0 : index
    %31 = vector.load %arg3[%c5, %c0_22, %c0_23] : memref<9x8x4xf32, #tpu.memory_space<vmem>>, vector<1x8x4xf32>
    %32 = vector.shape_cast %31 : vector<1x8x4xf32> to vector<8x4xf32>
    %cst_24 = arith.constant dense<0.000000e+00> : vector<8x512xf32>
    %33 = tpu.matmul %32, %30, %cst_24 {dimension_numbers = #tpu.dot_dimension_numbers<[1], [0], [0], [1], [0, 0, 1, 1], [], []>} : vector<8x4xf32>, vector<4x512xf32>, vector<8x512xf32> -> vector<8x512xf32>
    %34 = arith.addf %29, %33 : vector<8x512xf32>
    %c0_25 = arith.constant 0 : index
    %c0_26 = arith.constant 0 : index
    %c36 = arith.constant 36 : index
    %35 = vector.load %arg2[%c0_25, %c0_26, %c36] : memref<1x4x558xbf16, #tpu.memory_space<vmem>>, vector<1x4x512xbf16>
    %36 = vector.shape_cast %35 : vector<1x4x512xbf16> to vector<4x512xbf16>
    %37 = arith.extf %36 : vector<4x512xbf16> to vector<4x512xf32>
    %c6 = arith.constant 6 : index
    %c0_27 = arith.constant 0 : index
    %c0_28 = arith.constant 0 : index
    %38 = vector.load %arg3[%c6, %c0_27, %c0_28] : memref<9x8x4xf32, #tpu.memory_space<vmem>>, vector<1x8x4xf32>
    %39 = vector.shape_cast %38 : vector<1x8x4xf32> to vector<8x4xf32>
    %cst_29 = arith.constant dense<0.000000e+00> : vector<8x512xf32>
    %40 = tpu.matmul %39, %37, %cst_29 {dimension_numbers = #tpu.dot_dimension_numbers<[1], [0], [0], [1], [0, 0, 1, 1], [], []>} : vector<8x4xf32>, vector<4x512xf32>, vector<8x512xf32> -> vector<8x512xf32>
    %41 = arith.addf %34, %40 : vector<8x512xf32>
    %c511_i32_30 = arith.constant 511 : i32
    %42 = tpu.dynamic_rotate %37 by %c511_i32_30 dim 1 : vector<4x512xf32>, i32 -> vector<4x512xf32>
    %c7 = arith.constant 7 : index
    %c0_31 = arith.constant 0 : index
    %c0_32 = arith.constant 0 : index
    %43 = vector.load %arg3[%c7, %c0_31, %c0_32] : memref<9x8x4xf32, #tpu.memory_space<vmem>>, vector<1x8x4xf32>
    %44 = vector.shape_cast %43 : vector<1x8x4xf32> to vector<8x4xf32>
    %cst_33 = arith.constant dense<0.000000e+00> : vector<8x512xf32>
    %45 = tpu.matmul %44, %42, %cst_33 {dimension_numbers = #tpu.dot_dimension_numbers<[1], [0], [0], [1], [0, 0, 1, 1], [], []>} : vector<8x4xf32>, vector<4x512xf32>, vector<8x512xf32> -> vector<8x512xf32>
    %46 = arith.addf %41, %45 : vector<8x512xf32>
    %c510_i32_34 = arith.constant 510 : i32
    %47 = tpu.dynamic_rotate %37 by %c510_i32_34 dim 1 : vector<4x512xf32>, i32 -> vector<4x512xf32>
    %c8 = arith.constant 8 : index
    %c0_35 = arith.constant 0 : index
    %c0_36 = arith.constant 0 : index
    %48 = vector.load %arg3[%c8, %c0_35, %c0_36] : memref<9x8x4xf32, #tpu.memory_space<vmem>>, vector<1x8x4xf32>
    %49 = vector.shape_cast %48 : vector<1x8x4xf32> to vector<8x4xf32>
    %cst_37 = arith.constant dense<0.000000e+00> : vector<8x512xf32>
    %50 = tpu.matmul %49, %47, %cst_37 {dimension_numbers = #tpu.dot_dimension_numbers<[1], [0], [0], [1], [0, 0, 1, 1], [], []>} : vector<8x4xf32>, vector<4x512xf32>, vector<8x512xf32> -> vector<8x512xf32>
    %51 = arith.addf %46, %50 : vector<8x512xf32>
    %52 = vector.extract_strided_slice %51 {offsets = [0, 0], sizes = [8, 384], strides = [1, 1]} : vector<8x512xf32> to vector<8x384xf32>
    %c0_38 = arith.constant 0 : index
    %c0_39 = arith.constant 0 : index
    %53 = vector.load %arg4[%c0_38, %c0_39] : memref<8x1xf32, #tpu.memory_space<vmem>>, vector<8x1xf32>
    %54 = vector.broadcast %53 : vector<8x1xf32> to vector<8x384xf32>
    %55 = arith.addf %52, %54 : vector<8x384xf32>
    %cst_40 = arith.constant 0.000000e+00 : f32
    %56 = vector.broadcast %cst_40 : f32 to vector<8x384xf32>
    %57 = arith.maximumf %55, %56 : vector<8x384xf32>
    %c0_41 = arith.constant 0 : index
    %c0_42 = arith.constant 0 : index
    %c0_43 = arith.constant 0 : index
    %58 = vector.load %arg5[%c0_41, %c0_42, %c0_43] : memref<1x8x384xf32, #tpu.memory_space<vmem>>, vector<1x8x384xf32>
    %59 = vector.shape_cast %58 : vector<1x8x384xf32> to vector<8x384xf32>
    %60 = vector.shape_cast %57 : vector<8x384xf32> to vector<1x8x384xf32>
    tpu.vector_store %arg5[%c0_41, %c0_42, %c0_43], %60 {strides = array<i32>} : memref<1x8x384xf32, #tpu.memory_space<vmem>>, vector<1x8x384xf32>,
    return
  }
  func.func @transform_0(%arg0: i32, %arg1: i32) -> (i32, i32, i32) {
    %c0_i32 = arith.constant 0 : i32
    %c0_i32_0 = arith.constant 0 : i32
    %c0_i32_1 = arith.constant 0 : i32
    return %arg0, %c0_i32, %c0_i32_0 : i32, i32, i32
  }
  func.func @transform_1(%arg0: i32, %arg1: i32) -> (i32, i32, i32) {
    %c0_i32 = arith.constant 0 : i32
    %c0_i32_0 = arith.constant 0 : i32
    %c0_i32_1 = arith.constant 0 : i32
    %c0_i32_2 = arith.constant 0 : i32
    return %c0_i32, %c0_i32_0, %c0_i32_1 : i32, i32, i32
  }
  func.func @transform_2(%arg0: i32, %arg1: i32) -> (i32, i32) {
    %c0_i32 = arith.constant 0 : i32
    %c0_i32_0 = arith.constant 0 : i32
    %c0_i32_1 = arith.constant 0 : i32
    return %c0_i32, %c0_i32_0 : i32, i32
  }
  func.func @transform_3(%arg0: i32, %arg1: i32) -> (i32, i32, i32) {
    %c0_i32 = arith.constant 0 : i32
    %c0_i32_0 = arith.constant 0 : i32
    return %arg0, %c0_i32, %arg1 : i32, i32, i32
  }
}

</mosaic_0001>

<llo_original>
// kernel: tpu_custom_call.1
$region0: #{tpu_custom_call.1}
  #allocation0 [shape = 'u32[]', space=smem, size = 0x4, offset = 0x4, fixed_abs, tag = 'smem constant byte address 0x4 - core index']
  #allocation1 [shape = 'u32[144,128]{1,0:T(1,128)}', space=vmem, size = 0x12000, scoped, tag = 'internal scratch']
  %s0 = inlined_call_operand.vmem [shape: bf16[2,4,558], index: 0, kind: input, shape index: {}]
  %s1 = inlined_call_operand.vmem [shape: f32[9,8,4], index: 1, kind: input, shape index: {}]
  %s2 = inlined_call_operand.vmem [shape: f32[8,1], index: 2, kind: input, shape index: {}]
  %s3 = inlined_call_operand.hbm [shape: f32[2,8,384], index: 3, kind: output, shape index: {}]
  %s4 = sld [smem:[#allocation0]]
  $region45: #{tpu_custom_call.1} parent=0
    _
  %s6 = ssub.s32 1, %s4
  %s7 = scalar_select 0, %s6, %s4
  $region1: #{tpu_custom_call.1} parent=0
    #allocation2 [shape = 'u8[24576]{0}', space=vmem, size = 0x6000, scoped, tag = 'output window, operand 0']
    #allocation3 [shape = 's32[2]{0}', space=sflag, size = 0x8, scoped, tag = 'scoped memory for tpu_custom_call.1']
    %8 = vsyncpa [#allocation3], 0
    %s9 = scalar_lea.sflag [#allocation3], 1
    %10 = vsyncpa %s9, 0
    loop: start=0, step=1, limit=4
    $region2: #{tpu_custom_call.1} parent=1 // loop_pre_header
      _
    $region3: #{tpu_custom_call.1} parent=1 // loop_header
      %s12 = sphi 0, %s16
      %p13 = scmp.ge.s32.totalorder %s12, 4
      %s19 = sphi 0, %s31
      %s20 = sphi 0, %s27
      %s21 = sphi 0, %s19
      %s22 = sphi 0, %s20
      %s23 = sphi 0, %s21
      %s24 = sphi 0, %s22
      %s34 = sphi 0, %s36
      %s37 = sphi 0, %s34
      %s38 = sphi 0, %s37
      %s54 = sphi 0, %s38
      %s58 = sphi 0, %s58
      %s60 = sphi 0, %s58
      %s61 = sphi 0, %s60
      %s75 = sphi 0, %s61
      %s79 = sphi 0, %s79
      %s81 = sphi 0, %s79
      %s82 = sphi 0, %s81
      %s96 = sphi 0, %s82
      %s104 = sphi 0, %s106
      %s107 = sphi 0, %s104
      %s108 = sphi 0, %s107
      %s124 = sphi 0, %s108
    $region4: #{tpu_custom_call.1} parent=1 // loop_header_branch
      %15 = sbr.rel (%p13) target = $region8
    $region5: #{tpu_custom_call.1} parent=1 // loop_body
      %s17 = ssub.s32 %s12, 1
      %s18 = ssub.s32 %s12, 2
      %s25 = sadd.s32 1, %s20
      %p26 = scmp.ge.s32.totalorder %s25, 1
      %s27 = scalar_select %p26, 0, %s25
      %s28 = sadd.s32 1, %s19
      %s29 = scalar_select %p26, %s28, %s19
      %p30 = scmp.ge.s32.totalorder %s29, 2
      %s31 = scalar_select %p30, 0, %s29
      %s32 = ssub.s32 %s19, %s31
      %p33 = scmp.eq.s32.totalorder %s32, 0
      %s35 = sadd.s32 %s34, 1
      %s36 = scalar_select %p33, %s34, %s35
      %p39 = pneg %p33
      %p40 = scmp.eq.s32.totalorder %s12, 1
      %p41 = por %p39, %p40
      %p42 = scmp.ne.s32.totalorder %s34, %s37
      %p43 = scmp.eq.s32.totalorder %s12, 0
      %p44 = por %p42, %p43
      %p45 = scmp.ne.s32.totalorder %s34, %s37
      %p46 = scmp.eq.s32.totalorder %s17, 1
      %p47 = por %p45, %p46
      %p48 = scmp.ne.s32.totalorder %s37, %s38
      %p49 = scmp.eq.s32.totalorder %s17, 0
      %p50 = por %p48, %p49
      %p51 = scmp.ne.s32.totalorder %s37, %s38
      %p52 = scmp.eq.s32.totalorder %s18, 1
      %p53 = por %p51, %p52
      %p55 = scmp.ne.s32.totalorder %s38, %s54
      %p56 = scmp.eq.s32.totalorder %s18, 0
      %p57 = por %p55, %p56
      %s59 = sadd.s32 %s58, 1
      %p62 = scmp.eq.s32.totalorder %s12, 1
      %p63 = scmp.ne.s32.totalorder %s58, %s60
      %p64 = scmp.eq.s32.totalorder %s12, 0
      %p65 = por %p63, %p64
      %p66 = scmp.ne.s32.totalorder %s58, %s60
      %p67 = scmp.eq.s32.totalorder %s17, 1
      %p68 = por %p66, %p67
      %p69 = scmp.ne.s32.totalorder %s60, %s61
      %p70 = scmp.eq.s32.totalorder %s17, 0
      %p71 = por %p69, %p70
      %p72 = scmp.ne.s32.totalorder %s60, %s61
      %p73 = scmp.eq.s32.totalorder %s18, 1
      %p74 = por %p72, %p73
      %p76 = scmp.ne.s32.totalorder %s61, %s75
      %p77 = scmp.eq.s32.totalorder %s18, 0
      %p78 = por %p76, %p77
      %s80 = sadd.s32 %s79, 1
      %p83 = scmp.eq.s32.totalorder %s12, 1
      %p84 = scmp.ne.s32.totalorder %s79, %s81
      %p85 = scmp.eq.s32.totalorder %s12, 0
      %p86 = por %p84, %p85
      %p87 = scmp.ne.s32.totalorder %s79, %s81
      %p88 = scmp.eq.s32.totalorder %s17, 1
      %p89 = por %p87, %p88
      %p90 = scmp.ne.s32.totalorder %s81, %s82
      %p91 = scmp.eq.s32.totalorder %s17, 0
      %p92 = por %p90, %p91
      %p93 = scmp.ne.s32.totalorder %s81, %s82
      %p94 = scmp.eq.s32.totalorder %s18, 1
      %p95 = por %p93, %p94
      %p97 = scmp.ne.s32.totalorder %s82, %s96
      %p98 = scmp.eq.s32.totalorder %s18, 0
      %p99 = por %p97, %p98
      %s100 = ssub.s32 %s19, %s31
      %s101 = ssub.s32 %s20, %s27
      %s102 = sor.u32 %s100, %s101
      %p103 = scmp.eq.s32.totalorder %s102, 0
      %s105 = sadd.s32 %s104, 1
      %s106 = scalar_select %p103, %s104, %s105
      %p109 = pneg %p103
      %p110 = scmp.eq.s32.totalorder %s12, 1
      %p111 = por %p109, %p110
      %p112 = scmp.ne.s32.totalorder %s104, %s107
      %p113 = scmp.eq.s32.totalorder %s12, 0
      %p114 = por %p112, %p113
      %p115 = scmp.ne.s32.totalorder %s104, %s107
      %p116 = scmp.eq.s32.totalorder %s17, 1
      %p117 = por %p115, %p116
      %p118 = scmp.ne.s32.totalorder %s107, %s108
      %p119 = scmp.eq.s32.totalorder %s17, 0
      %p120 = por %p118, %p119
      %p121 = scmp.ne.s32.totalorder %s107, %s108
      %p122 = scmp.eq.s32.totalorder %s18, 1
      %p123 = por %p121, %p122
      %p125 = scmp.ne.s32.totalorder %s108, %s124
      %p126 = scmp.eq.s32.totalorder %s18, 0
      %p127 = por %p125, %p126
      %p128 = scmp.le.s32.totalorder 1, %s12
      %p129 = scmp.lt.s32.totalorder %s12, 3
      %p130 = pnand %p128, %p129
      %p131 = pneg %p130
      // Predicated region
      $region9: #{tpu_custom_call.1} parent=5 // pred_check
        _
      $region10: #{tpu_custom_call.1} parent=5 // pred_check_branch
        %133 = sbr.rel (%p130) target = $region12
      $region11: #{tpu_custom_call.1} parent=5 // pred_region
        %s134 = ssub.s32 %s12, 1
        // Predicated region
        $region13: #{tpu_custom_call.1} parent=11 // pred_check
          %p135 = pneg %p71
        $region14: #{tpu_custom_call.1} parent=11 // pred_check_branch
          %137 = sbr.rel (%p135) target = $region16
        $region15: #{tpu_custom_call.1} parent=11 // pred_region
          _
        $region16: #{tpu_custom_call.1} parent=11 // pred_fallthru
          _
        // Predicated region
        $region17: #{tpu_custom_call.1} parent=11 // pred_check
          %p138 = pneg %p92
        $region18: #{tpu_custom_call.1} parent=11 // pred_check_branch
          %140 = sbr.rel (%p138) target = $region20
        $region19: #{tpu_custom_call.1} parent=11 // pred_region
          _
        $region20: #{tpu_custom_call.1} parent=11 // pred_fallthru
          _
      $region12: #{tpu_custom_call.1} parent=5 // pred_fallthru
        _
      %p141 = scmp.lt.s32.totalorder %s12, 2
      // Predicated region
      $region21: #{tpu_custom_call.1} parent=5 // pred_check
        %p142 = pneg %p141
      $region22: #{tpu_custom_call.1} parent=5 // pred_check_branch
        %144 = sbr.rel (%p142) target = $region24
      $region23: #{tpu_custom_call.1} parent=5 // pred_region
        // Predicated region
        $region25: #{tpu_custom_call.1} parent=23 // pred_check
          %p145 = pneg %p44
        $region26: #{tpu_custom_call.1} parent=23 // pred_check_branch
          %147 = sbr.rel (%p145) target = $region28
        $region27: #{tpu_custom_call.1} parent=23 // pred_region
          %p148 = scmp.lt.s32.totalorder %s19, 1
          %s149 = scalar_select %p148, %s19, 1
          %s150 = smul.addr %s149, 5
          %s151 = smul.addr %s150, 2
          %s152 = scalar_lea.vmem %s0, %s151
        $region28: #{tpu_custom_call.1} parent=23 // pred_fallthru
          _
      $region24: #{tpu_custom_call.1} parent=5 // pred_fallthru
        _
      %p153 = scmp.le.s32.totalorder 1, %s12
      %p154 = scmp.lt.s32.totalorder %s12, 3
      %p155 = pnand %p153, %p154
      %p156 = pneg %p155
      // Predicated region
      $region29: #{tpu_custom_call.1} parent=5 // pred_check
        _
      $region30: #{tpu_custom_call.1} parent=5 // pred_check_branch
        %158 = sbr.rel (%p155) target = $region32
      $region31: #{tpu_custom_call.1} parent=5 // pred_region
        %s159 = ssub.s32 %s12, 1
        %p160 = scmp.lt.s32.totalorder %s21, 1
        %s161 = scalar_select %p160, %s21, 1
        %s162 = smul.addr %s161, 5
        %s163 = smul.addr %s162, 2
        %s164 = scalar_lea.vmem %s0, %s163
        %p165 = pneg %p50
        %p166 = pneg %p47
        %p167 = pneg %p71
        %p168 = pneg %p68
        %p169 = pneg %p92
        %p170 = pneg %p89
        %p171 = pneg %p120
        %p172 = pneg %p117
        %s173 = sand.u32 %s107, 1
        %s174 = scalar_lea.sflag [#allocation3], %s173
        %s175 = sand.u32 %s107, 1
        %s176 = smul.addr %s175, 24
        %s177 = scalar_lea.vmem [#allocation2], %s176
        %p178 = scmp.lt.s32.totalorder %s21, 1
        %s179 = scalar_select %p178, %s21, 1
        %s180 = smul.addr %s179, 5
        %s181 = smul.addr %s180, 2
        %s182 = scalar_lea.vmem %s0, %s181
        %s183 = smul.u32 3, %s22
        %v184 = vld [vmem:[%s182] sm:$0xff]
        %v185 = vunpack.c.l.bf16 %v184
        %v186 = vunpack.c.h.bf16 %v184
        %v187 = vld [vmem:[%s1] sm:$0xff]
        %v190 = vcombine.high %v185, %v185
        %v191 = vcombine.high %v186, %v186
        %194 = vrot.lane.b32.xlu0 %v185, 127
        %v195 = vpop.permute.xlu0 %194
        %196 = vrot.lane.b32.xlu0 %v190, 127
        %v197 = vpop.permute.xlu0 %196
        %198 = vrot.lane.b32.xlu0 %v186, 127
        %v199 = vpop.permute.xlu0 %198
        %200 = vrot.lane.b32.xlu0 %v191, 127
        %v201 = vpop.permute.xlu0 %200
        %v202 = vlaneseq
        %v203 = vand.u32 %v202, 127
        %vm204 = vcmp.lt.s32.totalorder %v203, 127
        %v205 = vsel %vm204, %v199, %v201
        %v206 = vsel %vm204, %v197, %v199
        %v207 = vsel %vm204, %v195, %v197
        %v208 = vsel %vm204, %v201, %v195
        %s209 = scalar_lea.vmem %s1, 8
        %v210 = vld [vmem:[%s209] sm:$0xff]
        %vm211 = vcmask 31744
        %v213 = vsel %vm211, %v210, 0
        %vm215 = vcmask 1043456
        %v217 = vsel %vm215, %v207, 0
        %v220 = vsel %vm215, %v206, 0
        %v223 = vsel %vm215, %v205, 0
        %v226 = vsel %vm215, %v208, 0
        %228 = vmatprep.subr.mxu0 %v220
        %229 = vmatpush1.msra.mxu0 %v217
        %230 = vmatprep.subr.mxu0 0.0
        %231 = vmatpush1.msra.mxu0 0.0
        %232 = vmatprep.subr.mxu0 0.0
        %233 = vmatpush1.msra.mxu0 0.0
        %234 = vmatprep.subr.mxu0 0.0
        %235 = vmatpush1.msra.mxu0 0.0
        %236 = vmatprep.subr.mxu0 0.0
        %237 = vmatpush1.msra.mxu0 0.0
        %238 = vmatprep.subr.mxu0 0.0
        %239 = vmatpush1.msra.mxu0 0.0
        %240 = vmatprep.subr.mxu0 0.0
        %241 = vmatpush1.msra.mxu0 0.0
        %242 = vmatprep.subr.mxu0 0.0
        %243 = vmatpush1.msra.mxu0 0.0
        %244 = vmatprep.subr.mxu0 0.0
        %245 = vmatpush1.msra.mxu0 0.0
        %246 = vmatprep.subr.mxu0 0.0
        %247 = vmatpush1.msra.mxu0 0.0
        %248 = vmatprep.subr.mxu0 0.0
        %249 = vmatpush1.msra.mxu0 0.0
        %250 = vmatprep.subr.mxu0 0.0
        %251 = vmatpush1.msra.mxu0 0.0
        %252 = vmatprep.subr.mxu0 0.0
        %253 = vmatpush1.msra.mxu0 0.0
        %254 = vmatprep.subr.mxu0 0.0
        %255 = vmatpush1.msra.mxu0 0.0
        %256 = vmatprep.subr.mxu0 0.0
        %257 = vmatpush1.msra.mxu0 0.0
        %258 = vmatprep.subr.mxu0 0.0
        %259 = vmatpush1.msra.mxu0 0.0
        %260 = vmatprep.subr.mxu0 0.0
        %261 = vmatpush1.msra.mxu0 0.0
        %262 = vmatprep.subr.mxu0 0.0
        %263 = vmatpush1.msra.mxu0 0.0
        %264 = vmatprep.subr.mxu0 0.0
        %265 = vmatpush1.msra.mxu0 0.0
        %266 = vmatprep.subr.mxu0 0.0
        %267 = vmatpush1.msra.mxu0 0.0
        %268 = vmatprep.subr.mxu0 0.0
        %269 = vmatpush1.msra.mxu0 0.0
        %270 = vmatprep.subr.mxu0 0.0
        %271 = vmatpush1.msra.mxu0 0.0
        %272 = vmatprep.subr.mxu0 0.0
        %273 = vmatpush1.msra.mxu0 0.0
        %274 = vmatprep.subr.mxu0 0.0
        %275 = vmatpush1.msra.mxu0 0.0
        %276 = vmatprep.subr.mxu0 0.0
        %277 = vmatpush1.msra.mxu0 0.0
        %278 = vmatprep.subr.mxu0 0.0
        %279 = vmatpush1.msra.mxu0 0.0
        %280 = vmatprep.subr.mxu0 0.0
        %281 = vmatpush1.msra.mxu0 0.0
        %282 = vmatprep.subr.mxu0 0.0
        %283 = vmatpush1.msra.mxu0 0.0
        %284 = vmatprep.subr.mxu0 0.0
        %285 = vmatpush1.msra.mxu0 0.0
        %286 = vmatprep.subr.mxu0 0.0
        %287 = vmatpush1.msra.mxu0 0.0
        %288 = vmatprep.subr.mxu0 0.0
        %289 = vmatpush1.msra.mxu0 0.0
        %290 = vmatprep.subr.mxu0 0.0
        %291 = vmatpush1.msra.mxu0 0.0
        %292 = vmatprep.mubr.f32.mxu0 0.0
        %293 = vmatmul.mubr.f32.gmra.mrb[0].mxu0 %v213
        %v294 = vpop.f32.mrb[0].mxu0
        %v295 = vadd.f32 0.0, %v294
        %v296 = vpop.f32.mrb[0].mxu0
        %v297 = vadd.f32 0.0, %v296
        %298 = vdwg.mxu0
        %299 = vmatprep.subr.mxu0 %v226
        %300 = vmatpush1.msra.mxu0 %v223
        %301 = vmatprep.subr.mxu0 0.0
        %302 = vmatpush1.msra.mxu0 0.0
        %303 = vmatprep.subr.mxu0 0.0
        %304 = vmatpush1.msra.mxu0 0.0
        %305 = vmatprep.subr.mxu0 0.0
        %306 = vmatpush1.msra.mxu0 0.0
        %307 = vmatprep.subr.mxu0 0.0
        %308 = vmatpush1.msra.mxu0 0.0
        %309 = vmatprep.subr.mxu0 0.0
        %310 = vmatpush1.msra.mxu0 0.0
        %311 = vmatprep.subr.mxu0 0.0
        %312 = vmatpush1.msra.mxu0 0.0
        %313 = vmatprep.subr.mxu0 0.0
        %314 = vmatpush1.msra.mxu0 0.0
        %315 = vmatprep.subr.mxu0 0.0
        %316 = vmatpush1.msra.mxu0 0.0
        %317 = vmatprep.subr.mxu0 0.0
        %318 = vmatpush1.msra.mxu0 0.0
        %319 = vmatprep.subr.mxu0 0.0
        %320 = vmatpush1.msra.mxu0 0.0
        %321 = vmatprep.subr.mxu0 0.0
        %322 = vmatpush1.msra.mxu0 0.0
        %323 = vmatprep.subr.mxu0 0.0
        %324 = vmatpush1.msra.mxu0 0.0
        %325 = vmatprep.subr.mxu0 0.0
        %326 = vmatpush1.msra.mxu0 0.0
        %327 = vmatprep.subr.mxu0 0.0
        %328 = vmatpush1.msra.mxu0 0.0
        %329 = vmatprep.subr.mxu0 0.0
        %330 = vmatpush1.msra.mxu0 0.0
        %331 = vmatprep.subr.mxu0 0.0
        %332 = vmatpush1.msra.mxu0 0.0
        %333 = vmatprep.subr.mxu0 0.0
        %334 = vmatpush1.msra.mxu0 0.0
        %335 = vmatprep.subr.mxu0 0.0
        %336 = vmatpush1.msra.mxu0 0.0
        %337 = vmatprep.subr.mxu0 0.0
        %338 = vmatpush1.msra.mxu0 0.0
        %339 = vmatprep.subr.mxu0 0.0
        %340 = vmatpush1.msra.mxu0 0.0
        %341 = vmatprep.subr.mxu0 0.0
        %342 = vmatpush1.msra.mxu0 0.0
        %343 = vmatprep.subr.mxu0 0.0
        %344 = vmatpush1.msra.mxu0 0.0
        %345 = vmatprep.subr.mxu0 0.0
        %346 = vmatpush1.msra.mxu0 0.0
        %347 = vmatprep.subr.mxu0 0.0
        %348 = vmatpush1.msra.mxu0 0.0
        %349 = vmatprep.subr.mxu0 0.0
        %350 = vmatpush1.msra.mxu0 0.0
        %351 = vmatprep.subr.mxu0 0.0
        %352 = vmatpush1.msra.mxu0 0.0
        %353 = vmatprep.subr.mxu0 0.0
        %354 = vmatpush1.msra.mxu0 0.0
        %355 = vmatprep.subr.mxu0 0.0
        %356 = vmatpush1.msra.mxu0 0.0
        %357 = vmatprep.subr.mxu0 0.0
        %358 = vmatpush1.msra.mxu0 0.0
        %359 = vmatprep.subr.mxu0 0.0
        %360 = vmatpush1.msra.mxu0 0.0
        %361 = vmatprep.subr.mxu0 0.0
        %362 = vmatpush1.msra.mxu0 0.0
        %363 = vmatprep.mubr.f32.mxu0 0.0
        %364 = vmatmul.mubr.f32.gmra.mrb[0].mxu0 %v213
        %v365 = vpop.f32.mrb[0].mxu0
        %v366 = vadd.f32 0.0, %v365
        %v367 = vpop.f32.mrb[0].mxu0
        %368 = vdwg.mxu0
        %v370 = vsel %vm211, %v187, 0
        %v372 = vsel %vm215, %v185, 0
        %v374 = vsel %vm215, %v190, 0
        %v376 = vsel %vm215, %v186, 0
        %v378 = vsel %vm215, %v191, 0
        %380 = vmatprep.subr.mxu0 %v374
        %381 = vmatpush1.msra.mxu0 %v372
        %382 = vmatprep.subr.mxu0 0.0
        %383 = vmatpush1.msra.mxu0 0.0
        %384 = vmatprep.subr.mxu0 0.0
        %385 = vmatpush1.msra.mxu0 0.0
        %386 = vmatprep.subr.mxu0 0.0
        %387 = vmatpush1.msra.mxu0 0.0
        %388 = vmatprep.subr.mxu0 0.0
        %389 = vmatpush1.msra.mxu0 0.0
        %390 = vmatprep.subr.mxu0 0.0
        %391 = vmatpush1.msra.mxu0 0.0
        %392 = vmatprep.subr.mxu0 0.0
        %393 = vmatpush1.msra.mxu0 0.0
        %394 = vmatprep.subr.mxu0 0.0
        %395 = vmatpush1.msra.mxu0 0.0
        %396 = vmatprep.subr.mxu0 0.0
        %397 = vmatpush1.msra.mxu0 0.0
        %398 = vmatprep.subr.mxu0 0.0
        %399 = vmatpush1.msra.mxu0 0.0
        %400 = vmatprep.subr.mxu0 0.0
        %401 = vmatpush1.msra.mxu0 0.0
        %402 = vmatprep.subr.mxu0 0.0
        %403 = vmatpush1.msra.mxu0 0.0
        %404 = vmatprep.subr.mxu0 0.0
        %405 = vmatpush1.msra.mxu0 0.0
        %406 = vmatprep.subr.mxu0 0.0
        %407 = vmatpush1.msra.mxu0 0.0
        %408 = vmatprep.subr.mxu0 0.0
        %409 = vmatpush1.msra.mxu0 0.0
        %410 = vmatprep.subr.mxu0 0.0
        %411 = vmatpush1.msra.mxu0 0.0
        %412 = vmatprep.subr.mxu0 0.0
        %413 = vmatpush1.msra.mxu0 0.0
        %414 = vmatprep.subr.mxu0 0.0
        %415 = vmatpush1.msra.mxu0 0.0
        %416 = vmatprep.subr.mxu0 0.0
        %417 = vmatpush1.msra.mxu0 0.0
        %418 = vmatprep.subr.mxu0 0.0
        %419 = vmatpush1.msra.mxu0 0.0
        %420 = vmatprep.subr.mxu0 0.0
        %421 = vmatpush1.msra.mxu0 0.0
        %422 = vmatprep.subr.mxu0 0.0
        %423 = vmatpush1.msra.mxu0 0.0
        %424 = vmatprep.subr.mxu0 0.0
        %425 = vmatpush1.msra.mxu0 0.0
        %426 = vmatprep.subr.mxu0 0.0
        %427 = vmatpush1.msra.mxu0 0.0
        %428 = vmatprep.subr.mxu0 0.0
        %429 = vmatpush1.msra.mxu0 0.0
        %430 = vmatprep.subr.mxu0 0.0
        %431 = vmatpush1.msra.mxu0 0.0
        %432 = vmatprep.subr.mxu0 0.0
        %433 = vmatpush1.msra.mxu0 0.0
        %434 = vmatprep.subr.mxu0 0.0
        %435 = vmatpush1.msra.mxu0 0.0
        %436 = vmatprep.subr.mxu0 0.0
        %437 = vmatpush1.msra.mxu0 0.0
        %438 = vmatprep.subr.mxu0 0.0
        %439 = vmatpush1.msra.mxu0 0.0
        %440 = vmatprep.subr.mxu0 0.0
        %441 = vmatpush1.msra.mxu0 0.0
        %442 = vmatprep.subr.mxu0 0.0
        %443 = vmatpush1.msra.mxu0 0.0
        %444 = vmatprep.mubr.f32.mxu0 0.0
        %445 = vmatmul.mubr.f32.gmra.mrb[0].mxu0 %v370
        %v446 = vpop.f32.mrb[0].mxu0
        %v447 = vadd.f32 %v295, %v446
        %v448 = vpop.f32.mrb[0].mxu0
        %v449 = vadd.f32 %v297, %v448
        %450 = vdwg.mxu0
        %451 = vmatprep.subr.mxu0 %v378
        %452 = vmatpush1.msra.mxu0 %v376
        %453 = vmatprep.subr.mxu0 0.0
        %454 = vmatpush1.msra.mxu0 0.0
        %455 = vmatprep.subr.mxu0 0.0
        %456 = vmatpush1.msra.mxu0 0.0
        %457 = vmatprep.subr.mxu0 0.0
        %458 = vmatpush1.msra.mxu0 0.0
        %459 = vmatprep.subr.mxu0 0.0
        %460 = vmatpush1.msra.mxu0 0.0
        %461 = vmatprep.subr.mxu0 0.0
        %462 = vmatpush1.msra.mxu0 0.0
        %463 = vmatprep.subr.mxu0 0.0
        %464 = vmatpush1.msra.mxu0 0.0
        %465 = vmatprep.subr.mxu0 0.0
        %466 = vmatpush1.msra.mxu0 0.0
        %467 = vmatprep.subr.mxu0 0.0
        %468 = vmatpush1.msra.mxu0 0.0
        %469 = vmatprep.subr.mxu0 0.0
        %470 = vmatpush1.msra.mxu0 0.0
        %471 = vmatprep.subr.mxu0 0.0
        %472 = vmatpush1.msra.mxu0 0.0
        %473 = vmatprep.subr.mxu0 0.0
        %474 = vmatpush1.msra.mxu0 0.0
        %475 = vmatprep.subr.mxu0 0.0
        %476 = vmatpush1.msra.mxu0 0.0
        %477 = vmatprep.subr.mxu0 0.0
        %478 = vmatpush1.msra.mxu0 0.0
        %479 = vmatprep.subr.mxu0 0.0
        %480 = vmatpush1.msra.mxu0 0.0
        %481 = vmatprep.subr.mxu0 0.0
        %482 = vmatpush1.msra.mxu0 0.0
        %483 = vmatprep.subr.mxu0 0.0
        %484 = vmatpush1.msra.mxu0 0.0
        %485 = vmatprep.subr.mxu0 0.0
        %486 = vmatpush1.msra.mxu0 0.0
        %487 = vmatprep.subr.mxu0 0.0
        %488 = vmatpush1.msra.mxu0 0.0
        %489 = vmatprep.subr.mxu0 0.0
        %490 = vmatpush1.msra.mxu0 0.0
        %491 = vmatprep.subr.mxu0 0.0
        %492 = vmatpush1.msra.mxu0 0.0
        %493 = vmatprep.subr.mxu0 0.0
        %494 = vmatpush1.msra.mxu0 0.0
        %495 = vmatprep.subr.mxu0 0.0
        %496 = vmatpush1.msra.mxu0 0.0
        %497 = vmatprep.subr.mxu0 0.0
        %498 = vmatpush1.msra.mxu0 0.0
        %499 = vmatprep.subr.mxu0 0.0
        %500 = vmatpush1.msra.mxu0 0.0
        %501 = vmatprep.subr.mxu0 0.0
        %502 = vmatpush1.msra.mxu0 0.0
        %503 = vmatprep.subr.mxu0 0.0
        %504 = vmatpush1.msra.mxu0 0.0
        %505 = vmatprep.subr.mxu0 0.0
        %506 = vmatpush1.msra.mxu0 0.0
        %507 = vmatprep.subr.mxu0 0.0
        %508 = vmatpush1.msra.mxu0 0.0
        %509 = vmatprep.subr.mxu0 0.0
        %510 = vmatpush1.msra.mxu0 0.0
        %511 = vmatprep.subr.mxu0 0.0
        %512 = vmatpush1.msra.mxu0 0.0
        %513 = vmatprep.subr.mxu0 0.0
        %514 = vmatpush1.msra.mxu0 0.0
        %515 = vmatprep.mubr.f32.mxu0 0.0
        %516 = vmatmul.mubr.f32.gmra.mrb[0].mxu0 %v370
        %v517 = vpop.f32.mrb[0].mxu0
        %v518 = vadd.f32 %v366, %v517
        %v519 = vpop.f32.mrb[0].mxu0
        %520 = vdwg.mxu0
        %521 = vrot.lane.b32.xlu0 %v185, 126
        %v522 = vpop.permute.xlu0 %521
        %523 = vrot.lane.b32.xlu0 %v190, 126
        %v524 = vpop.permute.xlu0 %523
        %525 = vrot.lane.b32.xlu0 %v186, 126
        %v526 = vpop.permute.xlu0 %525
        %527 = vrot.lane.b32.xlu0 %v191, 126
        %v528 = vpop.permute.xlu0 %527
        %vm529 = vcmp.lt.s32.totalorder %v203, 126
        %v530 = vsel %vm529, %v526, %v528
        %v531 = vsel %vm529, %v524, %v526
        %v532 = vsel %vm529, %v522, %v524
        %v533 = vsel %vm529, %v528, %v522
        %s534 = scalar_lea.vmem %s1, 16
        %v535 = vld [vmem:[%s534] sm:$0xff]
        %v537 = vsel %vm211, %v535, 0
        %v540 = vsel %vm215, %v532, 0
        %v543 = vsel %vm215, %v531, 0
        %v546 = vsel %vm215, %v530, 0
        %v549 = vsel %vm215, %v533, 0
        %551 = vmatprep.subr.mxu0 %v543
        %552 = vmatpush1.msra.mxu0 %v540
        %553 = vmatprep.subr.mxu0 0.0
        %554 = vmatpush1.msra.mxu0 0.0
        %555 = vmatprep.subr.mxu0 0.0
        %556 = vmatpush1.msra.mxu0 0.0
        %557 = vmatprep.subr.mxu0 0.0
        %558 = vmatpush1.msra.mxu0 0.0
        %559 = vmatprep.subr.mxu0 0.0
        %560 = vmatpush1.msra.mxu0 0.0
        %561 = vmatprep.subr.mxu0 0.0
        %562 = vmatpush1.msra.mxu0 0.0
        %563 = vmatprep.subr.mxu0 0.0
        %564 = vmatpush1.msra.mxu0 0.0
        %565 = vmatprep.subr.mxu0 0.0
        %566 = vmatpush1.msra.mxu0 0.0
        %567 = vmatprep.subr.mxu0 0.0
        %568 = vmatpush1.msra.mxu0 0.0
        %569 = vmatprep.subr.mxu0 0.0
        %570 = vmatpush1.msra.mxu0 0.0
        %571 = vmatprep.subr.mxu0 0.0
        %572 = vmatpush1.msra.mxu0 0.0
        %573 = vmatprep.subr.mxu0 0.0
        %574 = vmatpush1.msra.mxu0 0.0
        %575 = vmatprep.subr.mxu0 0.0
        %576 = vmatpush1.msra.mxu0 0.0
        %577 = vmatprep.subr.mxu0 0.0
        %578 = vmatpush1.msra.mxu0 0.0
        %579 = vmatprep.subr.mxu0 0.0
        %580 = vmatpush1.msra.mxu0 0.0
        %581 = vmatprep.subr.mxu0 0.0
        %582 = vmatpush1.msra.mxu0 0.0
        %583 = vmatprep.subr.mxu0 0.0
        %584 = vmatpush1.msra.mxu0 0.0
        %585 = vmatprep.subr.mxu0 0.0
        %586 = vmatpush1.msra.mxu0 0.0
        %587 = vmatprep.subr.mxu0 0.0
        %588 = vmatpush1.msra.mxu0 0.0
        %589 = vmatprep.subr.mxu0 0.0
        %590 = vmatpush1.msra.mxu0 0.0
        %591 = vmatprep.subr.mxu0 0.0
        %592 = vmatpush1.msra.mxu0 0.0
        %593 = vmatprep.subr.mxu0 0.0
        %594 = vmatpush1.msra.mxu0 0.0
        %595 = vmatprep.subr.mxu0 0.0
        %596 = vmatpush1.msra.mxu0 0.0
        %597 = vmatprep.subr.mxu0 0.0
        %598 = vmatpush1.msra.mxu0 0.0
        %599 = vmatprep.subr.mxu0 0.0
        %600 = vmatpush1.msra.mxu0 0.0
        %601 = vmatprep.subr.mxu0 0.0
        %602 = vmatpush1.msra.mxu0 0.0
        %603 = vmatprep.subr.mxu0 0.0
        %604 = vmatpush1.msra.mxu0 0.0
        %605 = vmatprep.subr.mxu0 0.0
        %606 = vmatpush1.msra.mxu0 0.0
        %607 = vmatprep.subr.mxu0 0.0
        %608 = vmatpush1.msra.mxu0 0.0
        %609 = vmatprep.subr.mxu0 0.0
        %610 = vmatpush1.msra.mxu0 0.0
        %611 = vmatprep.subr.mxu0 0.0
        %612 = vmatpush1.msra.mxu0 0.0
        %613 = vmatprep.subr.mxu0 0.0
        %614 = vmatpush1.msra.mxu0 0.0
        %615 = vmatprep.mubr.f32.mxu0 0.0
        %616 = vmatmul.mubr.f32.gmra.mrb[0].mxu0 %v537
        %v617 = vpop.f32.mrb[0].mxu0
        %v618 = vadd.f32 0.0, %v617
        %v619 = vpop.f32.mrb[0].mxu0
        %v620 = vadd.f32 0.0, %v619
        %621 = vdwg.mxu0
        %622 = vmatprep.subr.mxu0 %v549
        %623 = vmatpush1.msra.mxu0 %v546
        %624 = vmatprep.subr.mxu0 0.0
        %625 = vmatpush1.msra.mxu0 0.0
        %626 = vmatprep.subr.mxu0 0.0
        %627 = vmatpush1.msra.mxu0 0.0
        %628 = vmatprep.subr.mxu0 0.0
        %629 = vmatpush1.msra.mxu0 0.0
        %630 = vmatprep.subr.mxu0 0.0
        %631 = vmatpush1.msra.mxu0 0.0
        %632 = vmatprep.subr.mxu0 0.0
        %633 = vmatpush1.msra.mxu0 0.0
        %634 = vmatprep.subr.mxu0 0.0
        %635 = vmatpush1.msra.mxu0 0.0
        %636 = vmatprep.subr.mxu0 0.0
        %637 = vmatpush1.msra.mxu0 0.0
        %638 = vmatprep.subr.mxu0 0.0
        %639 = vmatpush1.msra.mxu0 0.0
        %640 = vmatprep.subr.mxu0 0.0
        %641 = vmatpush1.msra.mxu0 0.0
        %642 = vmatprep.subr.mxu0 0.0
        %643 = vmatpush1.msra.mxu0 0.0
        %644 = vmatprep.subr.mxu0 0.0
        %645 = vmatpush1.msra.mxu0 0.0
        %646 = vmatprep.subr.mxu0 0.0
        %647 = vmatpush1.msra.mxu0 0.0
        %648 = vmatprep.subr.mxu0 0.0
        %649 = vmatpush1.msra.mxu0 0.0
        %650 = vmatprep.subr.mxu0 0.0
        %651 = vmatpush1.msra.mxu0 0.0
        %652 = vmatprep.subr.mxu0 0.0
        %653 = vmatpush1.msra.mxu0 0.0
        %654 = vmatprep.subr.mxu0 0.0
        %655 = vmatpush1.msra.mxu0 0.0
        %656 = vmatprep.subr.mxu0 0.0
        %657 = vmatpush1.msra.mxu0 0.0
        %658 = vmatprep.subr.mxu0 0.0
        %659 = vmatpush1.msra.mxu0 0.0
        %660 = vmatprep.subr.mxu0 0.0
        %661 = vmatpush1.msra.mxu0 0.0
        %662 = vmatprep.subr.mxu0 0.0
        %663 = vmatpush1.msra.mxu0 0.0
        %664 = vmatprep.subr.mxu0 0.0
        %665 = vmatpush1.msra.mxu0 0.0
        %666 = vmatprep.subr.mxu0 0.0
        %667 = vmatpush1.msra.mxu0 0.0
        %668 = vmatprep.subr.mxu0 0.0
        %669 = vmatpush1.msra.mxu0 0.0
        %670 = vmatprep.subr.mxu0 0.0
        %671 = vmatpush1.msra.mxu0 0.0
        %672 = vmatprep.subr.mxu0 0.0
        %673 = vmatpush1.msra.mxu0 0.0
        %674 = vmatprep.subr.mxu0 0.0
        %675 = vmatpush1.msra.mxu0 0.0
        %676 = vmatprep.subr.mxu0 0.0
        %677 = vmatpush1.msra.mxu0 0.0
        %678 = vmatprep.subr.mxu0 0.0
        %679 = vmatpush1.msra.mxu0 0.0
        %680 = vmatprep.subr.mxu0 0.0
        %681 = vmatpush1.msra.mxu0 0.0
        %682 = vmatprep.subr.mxu0 0.0
        %683 = vmatpush1.msra.mxu0 0.0
        %684 = vmatprep.subr.mxu0 0.0
        %685 = vmatpush1.msra.mxu0 0.0
        %686 = vmatprep.mubr.f32.mxu0 0.0
        %687 = vmatmul.mubr.f32.gmra.mrb[0].mxu0 %v537
        %v688 = vpop.f32.mrb[0].mxu0
        %v689 = vadd.f32 0.0, %v688
        %v690 = vpop.f32.mrb[0].mxu0
        %691 = vdwg.mxu0
        %v692 = vadd.f32 %v447, %v618
        %v693 = vadd.f32 %v449, %v620
        %v694 = vadd.f32 %v518, %v689
        %v695 = vld [vmem:[%s182] sm:$0xff]
        %v696 = vld [vmem:[%s182 + $0x8] sm:$0x3]
        %v697 = vunpack.c.l.bf16 %v695
        %v698 = vunpack.c.h.bf16 %v695
        %v699 = vunpack.c.l.bf16 %v696
        %s700 = scalar_lea.vmem %s1, 24
        %v701 = vld [vmem:[%s700] sm:$0xff]
        %v705 = vcombine.high %v697, %v697
        %v706 = vcombine.high %v698, %v698
        %707 = vrot.lane.b32.xlu0 %v697, 110
        %v708 = vpop.permute.xlu0 %707
        %709 = vrot.lane.b32.xlu0 %v705, 110
        %v710 = vpop.permute.xlu0 %709
        %711 = vrot.lane.b32.xlu0 %v698, 110
        %v712 = vpop.permute.xlu0 %711
        %713 = vrot.lane.b32.xlu0 %v706, 110
        %v714 = vpop.permute.xlu0 %713
        %715 = vrot.lane.b32.xlu0 %v699, 110
        %v716 = vpop.permute.xlu0 %715
        %vm717 = vcmask 900096
        %v718 = vsel %vm717, %v708, %v710
        %v719 = vsel %vm717, %v710, %v712
        %v720 = vsel %vm717, %v712, %v714
        %v721 = vsel %vm717, %v714, %v716
        %v723 = vsel %vm211, %v701, 0
        %v725 = vsel %vm215, %v718, 0
        %v727 = vsel %vm215, %v719, 0
        %v729 = vsel %vm215, %v720, 0
        %v731 = vsel %vm215, %v721, 0
        %733 = vmatprep.subr.mxu0 %v727
        %734 = vmatpush1.msra.mxu0 %v725
        %735 = vmatprep.subr.mxu0 0.0
        %736 = vmatpush1.msra.mxu0 0.0
        %737 = vmatprep.subr.mxu0 0.0
        %738 = vmatpush1.msra.mxu0 0.0
        %739 = vmatprep.subr.mxu0 0.0
        %740 = vmatpush1.msra.mxu0 0.0
        %741 = vmatprep.subr.mxu0 0.0
        %742 = vmatpush1.msra.mxu0 0.0
        %743 = vmatprep.subr.mxu0 0.0
        %744 = vmatpush1.msra.mxu0 0.0
        %745 = vmatprep.subr.mxu0 0.0
        %746 = vmatpush1.msra.mxu0 0.0
        %747 = vmatprep.subr.mxu0 0.0
        %748 = vmatpush1.msra.mxu0 0.0
        %749 = vmatprep.subr.mxu0 0.0
        %750 = vmatpush1.msra.mxu0 0.0
        %751 = vmatprep.subr.mxu0 0.0
        %752 = vmatpush1.msra.mxu0 0.0
        %753 = vmatprep.subr.mxu0 0.0
        %754 = vmatpush1.msra.mxu0 0.0
        %755 = vmatprep.subr.mxu0 0.0
        %756 = vmatpush1.msra.mxu0 0.0
        %757 = vmatprep.subr.mxu0 0.0
        %758 = vmatpush1.msra.mxu0 0.0
        %759 = vmatprep.subr.mxu0 0.0
        %760 = vmatpush1.msra.mxu0 0.0
        %761 = vmatprep.subr.mxu0 0.0
        %762 = vmatpush1.msra.mxu0 0.0
        %763 = vmatprep.subr.mxu0 0.0
        %764 = vmatpush1.msra.mxu0 0.0
        %765 = vmatprep.subr.mxu0 0.0
        %766 = vmatpush1.msra.mxu0 0.0
        %767 = vmatprep.subr.mxu0 0.0
        %768 = vmatpush1.msra.mxu0 0.0
        %769 = vmatprep.subr.mxu0 0.0
        %770 = vmatpush1.msra.mxu0 0.0
        %771 = vmatprep.subr.mxu0 0.0
        %772 = vmatpush1.msra.mxu0 0.0
        %773 = vmatprep.subr.mxu0 0.0
        %774 = vmatpush1.msra.mxu0 0.0
        %775 = vmatprep.subr.mxu0 0.0
        %776 = vmatpush1.msra.mxu0 0.0
        %777 = vmatprep.subr.mxu0 0.0
        %778 = vmatpush1.msra.mxu0 0.0
        %779 = vmatprep.subr.mxu0 0.0
        %780 = vmatpush1.msra.mxu0 0.0
        %781 = vmatprep.subr.mxu0 0.0
        %782 = vmatpush1.msra.mxu0 0.0
        %783 = vmatprep.subr.mxu0 0.0
        %784 = vmatpush1.msra.mxu0 0.0
        %785 = vmatprep.subr.mxu0 0.0
        %786 = vmatpush1.msra.mxu0 0.0
        %787 = vmatprep.subr.mxu0 0.0
        %788 = vmatpush1.msra.mxu0 0.0
        %789 = vmatprep.subr.mxu0 0.0
        %790 = vmatpush1.msra.mxu0 0.0
        %791 = vmatprep.subr.mxu0 0.0
        %792 = vmatpush1.msra.mxu0 0.0
        %793 = vmatprep.subr.mxu0 0.0
        %794 = vmatpush1.msra.mxu0 0.0
        %795 = vmatprep.subr.mxu0 0.0
        %796 = vmatpush1.msra.mxu0 0.0
        %797 = vmatprep.mubr.f32.mxu0 0.0
        %798 = vmatmul.mubr.f32.gmra.mrb[0].mxu0 %v723
        %v799 = vpop.f32.mrb[0].mxu0
        %v800 = vadd.f32 0.0, %v799
        %v801 = vpop.f32.mrb[0].mxu0
        %v802 = vadd.f32 0.0, %v801
        %803 = vdwg.mxu0
        %804 = vmatprep.subr.mxu0 %v731
        %805 = vmatpush1.msra.mxu0 %v729
        %806 = vmatprep.subr.mxu0 0.0
        %807 = vmatpush1.msra.mxu0 0.0
        %808 = vmatprep.subr.mxu0 0.0
        %809 = vmatpush1.msra.mxu0 0.0
        %810 = vmatprep.subr.mxu0 0.0
        %811 = vmatpush1.msra.mxu0 0.0
        %812 = vmatprep.subr.mxu0 0.0
        %813 = vmatpush1.msra.mxu0 0.0
        %814 = vmatprep.subr.mxu0 0.0
        %815 = vmatpush1.msra.mxu0 0.0
        %816 = vmatprep.subr.mxu0 0.0
        %817 = vmatpush1.msra.mxu0 0.0
        %818 = vmatprep.subr.mxu0 0.0
        %819 = vmatpush1.msra.mxu0 0.0
        %820 = vmatprep.subr.mxu0 0.0
        %821 = vmatpush1.msra.mxu0 0.0
        %822 = vmatprep.subr.mxu0 0.0
        %823 = vmatpush1.msra.mxu0 0.0
        %824 = vmatprep.subr.mxu0 0.0
        %825 = vmatpush1.msra.mxu0 0.0
        %826 = vmatprep.subr.mxu0 0.0
        %827 = vmatpush1.msra.mxu0 0.0
        %828 = vmatprep.subr.mxu0 0.0
        %829 = vmatpush1.msra.mxu0 0.0
        %830 = vmatprep.subr.mxu0 0.0
        %831 = vmatpush1.msra.mxu0 0.0
        %832 = vmatprep.subr.mxu0 0.0
        %833 = vmatpush1.msra.mxu0 0.0
        %834 = vmatprep.subr.mxu0 0.0
        %835 = vmatpush1.msra.mxu0 0.0
        %836 = vmatprep.subr.mxu0 0.0
        %837 = vmatpush1.msra.mxu0 0.0
        %838 = vmatprep.subr.mxu0 0.0
        %839 = vmatpush1.msra.mxu0 0.0
        %840 = vmatprep.subr.mxu0 0.0
        %841 = vmatpush1.msra.mxu0 0.0
        %842 = vmatprep.subr.mxu0 0.0
        %843 = vmatpush1.msra.mxu0 0.0
        %844 = vmatprep.subr.mxu0 0.0
        %845 = vmatpush1.msra.mxu0 0.0
        %846 = vmatprep.subr.mxu0 0.0
        %847 = vmatpush1.msra.mxu0 0.0
        %848 = vmatprep.subr.mxu0 0.0
        %849 = vmatpush1.msra.mxu0 0.0
        %850 = vmatprep.subr.mxu0 0.0
        %851 = vmatpush1.msra.mxu0 0.0
        %852 = vmatprep.subr.mxu0 0.0
        %853 = vmatpush1.msra.mxu0 0.0
        %854 = vmatprep.subr.mxu0 0.0
        %855 = vmatpush1.msra.mxu0 0.0
        %856 = vmatprep.subr.mxu0 0.0
        %857 = vmatpush1.msra.mxu0 0.0
        %858 = vmatprep.subr.mxu0 0.0
        %859 = vmatpush1.msra.mxu0 0.0
        %860 = vmatprep.subr.mxu0 0.0
        %861 = vmatpush1.msra.mxu0 0.0
        %862 = vmatprep.subr.mxu0 0.0
        %863 = vmatpush1.msra.mxu0 0.0
        %864 = vmatprep.subr.mxu0 0.0
        %865 = vmatpush1.msra.mxu0 0.0
        %866 = vmatprep.subr.mxu0 0.0
        %867 = vmatpush1.msra.mxu0 0.0
        %868 = vmatprep.mubr.f32.mxu0 0.0
        %869 = vmatmul.mubr.f32.gmra.mrb[0].mxu0 %v723
        %v870 = vpop.f32.mrb[0].mxu0
        %v871 = vadd.f32 0.0, %v870
        %v872 = vpop.f32.mrb[0].mxu0
        %873 = vdwg.mxu0
        %v874 = vadd.f32 %v692, %v800
        %v875 = vadd.f32 %v693, %v802
        %v876 = vadd.f32 %v694, %v871
        %881 = vrot.lane.b32.xlu0 %v718, 127
        %v882 = vpop.permute.xlu0 %881
        %883 = vrot.lane.b32.xlu0 %v719, 127
        %v884 = vpop.permute.xlu0 %883
        %885 = vrot.lane.b32.xlu0 %v720, 127
        %v886 = vpop.permute.xlu0 %885
        %887 = vrot.lane.b32.xlu0 %v721, 127
        %v888 = vpop.permute.xlu0 %887
        %v889 = vsel %vm204, %v886, %v888
        %v890 = vsel %vm204, %v884, %v886
        %v891 = vsel %vm204, %v882, %v884
        %v892 = vsel %vm204, %v888, %v882
        %s893 = scalar_lea.vmem %s1, 32
        %v894 = vld [vmem:[%s893] sm:$0xff]
        %v896 = vsel %vm211, %v894, 0
        %v899 = vsel %vm215, %v891, 0
        %v902 = vsel %vm215, %v890, 0
        %v905 = vsel %vm215, %v889, 0
        %v908 = vsel %vm215, %v892, 0
        %910 = vmatprep.subr.mxu0 %v902
        %911 = vmatpush1.msra.mxu0 %v899
        %912 = vmatprep.subr.mxu0 0.0
        %913 = vmatpush1.msra.mxu0 0.0
        %914 = vmatprep.subr.mxu0 0.0
        %915 = vmatpush1.msra.mxu0 0.0
        %916 = vmatprep.subr.mxu0 0.0
        %917 = vmatpush1.msra.mxu0 0.0
        %918 = vmatprep.subr.mxu0 0.0
        %919 = vmatpush1.msra.mxu0 0.0
        %920 = vmatprep.subr.mxu0 0.0
        %921 = vmatpush1.msra.mxu0 0.0
        %922 = vmatprep.subr.mxu0 0.0
        %923 = vmatpush1.msra.mxu0 0.0
        %924 = vmatprep.subr.mxu0 0.0
        %925 = vmatpush1.msra.mxu0 0.0
        %926 = vmatprep.subr.mxu0 0.0
        %927 = vmatpush1.msra.mxu0 0.0
        %928 = vmatprep.subr.mxu0 0.0
        %929 = vmatpush1.msra.mxu0 0.0
        %930 = vmatprep.subr.mxu0 0.0
        %931 = vmatpush1.msra.mxu0 0.0
        %932 = vmatprep.subr.mxu0 0.0
        %933 = vmatpush1.msra.mxu0 0.0
        %934 = vmatprep.subr.mxu0 0.0
        %935 = vmatpush1.msra.mxu0 0.0
        %936 = vmatprep.subr.mxu0 0.0
        %937 = vmatpush1.msra.mxu0 0.0
        %938 = vmatprep.subr.mxu0 0.0
        %939 = vmatpush1.msra.mxu0 0.0
        %940 = vmatprep.subr.mxu0 0.0
        %941 = vmatpush1.msra.mxu0 0.0
        %942 = vmatprep.subr.mxu0 0.0
        %943 = vmatpush1.msra.mxu0 0.0
        %944 = vmatprep.subr.mxu0 0.0
        %945 = vmatpush1.msra.mxu0 0.0
        %946 = vmatprep.subr.mxu0 0.0
        %947 = vmatpush1.msra.mxu0 0.0
        %948 = vmatprep.subr.mxu0 0.0
        %949 = vmatpush1.msra.mxu0 0.0
        %950 = vmatprep.subr.mxu0 0.0
        %951 = vmatpush1.msra.mxu0 0.0
        %952 = vmatprep.subr.mxu0 0.0
        %953 = vmatpush1.msra.mxu0 0.0
        %954 = vmatprep.subr.mxu0 0.0
        %955 = vmatpush1.msra.mxu0 0.0
        %956 = vmatprep.subr.mxu0 0.0
        %957 = vmatpush1.msra.mxu0 0.0
        %958 = vmatprep.subr.mxu0 0.0
        %959 = vmatpush1.msra.mxu0 0.0
        %960 = vmatprep.subr.mxu0 0.0
        %961 = vmatpush1.msra.mxu0 0.0
        %962 = vmatprep.subr.mxu0 0.0
        %963 = vmatpush1.msra.mxu0 0.0
        %964 = vmatprep.subr.mxu0 0.0
        %965 = vmatpush1.msra.mxu0 0.0
        %966 = vmatprep.subr.mxu0 0.0
        %967 = vmatpush1.msra.mxu0 0.0
        %968 = vmatprep.subr.mxu0 0.0
        %969 = vmatpush1.msra.mxu0 0.0
        %970 = vmatprep.subr.mxu0 0.0
        %971 = vmatpush1.msra.mxu0 0.0
        %972 = vmatprep.subr.mxu0 0.0
        %973 = vmatpush1.msra.mxu0 0.0
        %974 = vmatprep.mubr.f32.mxu0 0.0
        %975 = vmatmul.mubr.f32.gmra.mrb[0].mxu0 %v896
        %v976 = vpop.f32.mrb[0].mxu0
        %v977 = vadd.f32 0.0, %v976
        %v978 = vpop.f32.mrb[0].mxu0
        %v979 = vadd.f32 0.0, %v978
        %980 = vdwg.mxu0
        %981 = vmatprep.subr.mxu0 %v908
        %982 = vmatpush1.msra.mxu0 %v905
        %983 = vmatprep.subr.mxu0 0.0
        %984 = vmatpush1.msra.mxu0 0.0
        %985 = vmatprep.subr.mxu0 0.0
        %986 = vmatpush1.msra.mxu0 0.0
        %987 = vmatprep.subr.mxu0 0.0
        %988 = vmatpush1.msra.mxu0 0.0
        %989 = vmatprep.subr.mxu0 0.0
        %990 = vmatpush1.msra.mxu0 0.0
        %991 = vmatprep.subr.mxu0 0.0
        %992 = vmatpush1.msra.mxu0 0.0
        %993 = vmatprep.subr.mxu0 0.0
        %994 = vmatpush1.msra.mxu0 0.0
        %995 = vmatprep.subr.mxu0 0.0
        %996 = vmatpush1.msra.mxu0 0.0
        %997 = vmatprep.subr.mxu0 0.0
        %998 = vmatpush1.msra.mxu0 0.0
        %999 = vmatprep.subr.mxu0 0.0
        %1000 = vmatpush1.msra.mxu0 0.0
        %1001 = vmatprep.subr.mxu0 0.0
        %1002 = vmatpush1.msra.mxu0 0.0
        %1003 = vmatprep.subr.mxu0 0.0
        %1004 = vmatpush1.msra.mxu0 0.0
        %1005 = vmatprep.subr.mxu0 0.0
        %1006 = vmatpush1.msra.mxu0 0.0
        %1007 = vmatprep.subr.mxu0 0.0
        %1008 = vmatpush1.msra.mxu0 0.0
        %1009 = vmatprep.subr.mxu0 0.0
        %1010 = vmatpush1.msra.mxu0 0.0
        %1011 = vmatprep.subr.mxu0 0.0
        %1012 = vmatpush1.msra.mxu0 0.0
        %1013 = vmatprep.subr.mxu0 0.0
        %1014 = vmatpush1.msra.mxu0 0.0
        %1015 = vmatprep.subr.mxu0 0.0
        %1016 = vmatpush1.msra.mxu0 0.0
        %1017 = vmatprep.subr.mxu0 0.0
        %1018 = vmatpush1.msra.mxu0 0.0
        %1019 = vmatprep.subr.mxu0 0.0
        %1020 = vmatpush1.msra.mxu0 0.0
        %1021 = vmatprep.subr.mxu0 0.0
        %1022 = vmatpush1.msra.mxu0 0.0
        %1023 = vmatprep.subr.mxu0 0.0
        %1024 = vmatpush1.msra.mxu0 0.0
        %1025 = vmatprep.subr.mxu0 0.0
        %1026 = vmatpush1.msra.mxu0 0.0
        %1027 = vmatprep.subr.mxu0 0.0
        %1028 = vmatpush1.msra.mxu0 0.0
        %1029 = vmatprep.subr.mxu0 0.0
        %1030 = vmatpush1.msra.mxu0 0.0
        %1031 = vmatprep.subr.mxu0 0.0
        %1032 = vmatpush1.msra.mxu0 0.0
        %1033 = vmatprep.subr.mxu0 0.0
        %1034 = vmatpush1.msra.mxu0 0.0
        %1035 = vmatprep.subr.mxu0 0.0
        %1036 = vmatpush1.msra.mxu0 0.0
        %1037 = vmatprep.subr.mxu0 0.0
        %1038 = vmatpush1.msra.mxu0 0.0
        %1039 = vmatprep.subr.mxu0 0.0
        %1040 = vmatpush1.msra.mxu0 0.0
        %1041 = vmatprep.subr.mxu0 0.0
        %1042 = vmatpush1.msra.mxu0 0.0
        %1043 = vmatprep.subr.mxu0 0.0
        %1044 = vmatpush1.msra.mxu0 0.0
        %1045 = vmatprep.mubr.f32.mxu0 0.0
        %1046 = vmatmul.mubr.f32.gmra.mrb[0].mxu0 %v896
        %v1047 = vpop.f32.mrb[0].mxu0
        %v1048 = vadd.f32 0.0, %v1047
        %v1049 = vpop.f32.mrb[0].mxu0
        %1050 = vdwg.mxu0
        %v1051 = vadd.f32 %v874, %v977
        %v1052 = vadd.f32 %v875, %v979
        %v1053 = vadd.f32 %v876, %v1048
        %1054 = vrot.lane.b32.xlu0 %v718, 126
        %v1055 = vpop.permute.xlu0 %1054
        %1056 = vrot.lane.b32.xlu0 %v719, 126
        %v1057 = vpop.permute.xlu0 %1056
        %1058 = vrot.lane.b32.xlu0 %v720, 126
        %v1059 = vpop.permute.xlu0 %1058
        %1060 = vrot.lane.b32.xlu0 %v721, 126
        %v1061 = vpop.permute.xlu0 %1060
        %v1062 = vsel %vm529, %v1059, %v1061
        %v1063 = vsel %vm529, %v1057, %v1059
        %v1064 = vsel %vm529, %v1055, %v1057
        %v1065 = vsel %vm529, %v1061, %v1055
        %s1066 = scalar_lea.vmem %s1, 40
        %v1067 = vld [vmem:[%s1066] sm:$0xff]
        %v1069 = vsel %vm211, %v1067, 0
        %v1072 = vsel %vm215, %v1064, 0
        %v1075 = vsel %vm215, %v1063, 0
        %v1078 = vsel %vm215, %v1062, 0
        %v1081 = vsel %vm215, %v1065, 0
        %1083 = vmatprep.subr.mxu0 %v1075
        %1084 = vmatpush1.msra.mxu0 %v1072
        %1085 = vmatprep.subr.mxu0 0.0
        %1086 = vmatpush1.msra.mxu0 0.0
        %1087 = vmatprep.subr.mxu0 0.0
        %1088 = vmatpush1.msra.mxu0 0.0
        %1089 = vmatprep.subr.mxu0 0.0
        %1090 = vmatpush1.msra.mxu0 0.0
        %1091 = vmatprep.subr.mxu0 0.0
        %1092 = vmatpush1.msra.mxu0 0.0
        %1093 = vmatprep.subr.mxu0 0.0
        %1094 = vmatpush1.msra.mxu0 0.0
        %1095 = vmatprep.subr.mxu0 0.0
        %1096 = vmatpush1.msra.mxu0 0.0
        %1097 = vmatprep.subr.mxu0 0.0
        %1098 = vmatpush1.msra.mxu0 0.0
        %1099 = vmatprep.subr.mxu0 0.0
        %1100 = vmatpush1.msra.mxu0 0.0
        %1101 = vmatprep.subr.mxu0 0.0
        %1102 = vmatpush1.msra.mxu0 0.0
        %1103 = vmatprep.subr.mxu0 0.0
        %1104 = vmatpush1.msra.mxu0 0.0
        %1105 = vmatprep.subr.mxu0 0.0
        %1106 = vmatpush1.msra.mxu0 0.0
        %1107 = vmatprep.subr.mxu0 0.0
        %1108 = vmatpush1.msra.mxu0 0.0
        %1109 = vmatprep.subr.mxu0 0.0
        %1110 = vmatpush1.msra.mxu0 0.0
        %1111 = vmatprep.subr.mxu0 0.0
        %1112 = vmatpush1.msra.mxu0 0.0
        %1113 = vmatprep.subr.mxu0 0.0
        %1114 = vmatpush1.msra.mxu0 0.0
        %1115 = vmatprep.subr.mxu0 0.0
        %1116 = vmatpush1.msra.mxu0 0.0
        %1117 = vmatprep.subr.mxu0 0.0
        %1118 = vmatpush1.msra.mxu0 0.0
        %1119 = vmatprep.subr.mxu0 0.0
        %1120 = vmatpush1.msra.mxu0 0.0
        %1121 = vmatprep.subr.mxu0 0.0
        %1122 = vmatpush1.msra.mxu0 0.0
        %1123 = vmatprep.subr.mxu0 0.0
        %1124 = vmatpush1.msra.mxu0 0.0
        %1125 = vmatprep.subr.mxu0 0.0
        %1126 = vmatpush1.msra.mxu0 0.0
        %1127 = vmatprep.subr.mxu0 0.0
        %1128 = vmatpush1.msra.mxu0 0.0
        %1129 = vmatprep.subr.mxu0 0.0
        %1130 = vmatpush1.msra.mxu0 0.0
        %1131 = vmatprep.subr.mxu0 0.0
        %1132 = vmatpush1.msra.mxu0 0.0
        %1133 = vmatprep.subr.mxu0 0.0
        %1134 = vmatpush1.msra.mxu0 0.0
        %1135 = vmatprep.subr.mxu0 0.0
        %1136 = vmatpush1.msra.mxu0 0.0
        %1137 = vmatprep.subr.mxu0 0.0
        %1138 = vmatpush1.msra.mxu0 0.0
        %1139 = vmatprep.subr.mxu0 0.0
        %1140 = vmatpush1.msra.mxu0 0.0
        %1141 = vmatprep.subr.mxu0 0.0
        %1142 = vmatpush1.msra.mxu0 0.0
        %1143 = vmatprep.subr.mxu0 0.0
        %1144 = vmatpush1.msra.mxu0 0.0
        %1145 = vmatprep.subr.mxu0 0.0
        %1146 = vmatpush1.msra.mxu0 0.0
        %1147 = vmatprep.mubr.f32.mxu0 0.0
        %1148 = vmatmul.mubr.f32.gmra.mrb[0].mxu0 %v1069
        %v1149 = vpop.f32.mrb[0].mxu0
        %v1150 = vadd.f32 0.0, %v1149
        %v1151 = vpop.f32.mrb[0].mxu0
        %v1152 = vadd.f32 0.0, %v1151
        %1153 = vdwg.mxu0
        %1154 = vmatprep.subr.mxu0 %v1081
        %1155 = vmatpush1.msra.mxu0 %v1078
        %1156 = vmatprep.subr.mxu0 0.0
        %1157 = vmatpush1.msra.mxu0 0.0
        %1158 = vmatprep.subr.mxu0 0.0
        %1159 = vmatpush1.msra.mxu0 0.0
        %1160 = vmatprep.subr.mxu0 0.0
        %1161 = vmatpush1.msra.mxu0 0.0
        %1162 = vmatprep.subr.mxu0 0.0
        %1163 = vmatpush1.msra.mxu0 0.0
        %1164 = vmatprep.subr.mxu0 0.0
        %1165 = vmatpush1.msra.mxu0 0.0
        %1166 = vmatprep.subr.mxu0 0.0
        %1167 = vmatpush1.msra.mxu0 0.0
        %1168 = vmatprep.subr.mxu0 0.0
        %1169 = vmatpush1.msra.mxu0 0.0
        %1170 = vmatprep.subr.mxu0 0.0
        %1171 = vmatpush1.msra.mxu0 0.0
        %1172 = vmatprep.subr.mxu0 0.0
        %1173 = vmatpush1.msra.mxu0 0.0
        %1174 = vmatprep.subr.mxu0 0.0
        %1175 = vmatpush1.msra.mxu0 0.0
        %1176 = vmatprep.subr.mxu0 0.0
        %1177 = vmatpush1.msra.mxu0 0.0
        %1178 = vmatprep.subr.mxu0 0.0
        %1179 = vmatpush1.msra.mxu0 0.0
        %1180 = vmatprep.subr.mxu0 0.0
        %1181 = vmatpush1.msra.mxu0 0.0
        %1182 = vmatprep.subr.mxu0 0.0
        %1183 = vmatpush1.msra.mxu0 0.0
        %1184 = vmatprep.subr.mxu0 0.0
        %1185 = vmatpush1.msra.mxu0 0.0
        %1186 = vmatprep.subr.mxu0 0.0
        %1187 = vmatpush1.msra.mxu0 0.0
        %1188 = vmatprep.subr.mxu0 0.0
        %1189 = vmatpush1.msra.mxu0 0.0
        %1190 = vmatprep.subr.mxu0 0.0
        %1191 = vmatpush1.msra.mxu0 0.0
        %1192 = vmatprep.subr.mxu0 0.0
        %1193 = vmatpush1.msra.mxu0 0.0
        %1194 = vmatprep.subr.mxu0 0.0
        %1195 = vmatpush1.msra.mxu0 0.0
        %1196 = vmatprep.subr.mxu0 0.0
        %1197 = vmatpush1.msra.mxu0 0.0
        %1198 = vmatprep.subr.mxu0 0.0
        %1199 = vmatpush1.msra.mxu0 0.0
        %1200 = vmatprep.subr.mxu0 0.0
        %1201 = vmatpush1.msra.mxu0 0.0
        %1202 = vmatprep.subr.mxu0 0.0
        %1203 = vmatpush1.msra.mxu0 0.0
        %1204 = vmatprep.subr.mxu0 0.0
        %1205 = vmatpush1.msra.mxu0 0.0
        %1206 = vmatprep.subr.mxu0 0.0
        %1207 = vmatpush1.msra.mxu0 0.0
        %1208 = vmatprep.subr.mxu0 0.0
        %1209 = vmatpush1.msra.mxu0 0.0
        %1210 = vmatprep.subr.mxu0 0.0
        %1211 = vmatpush1.msra.mxu0 0.0
        %1212 = vmatprep.subr.mxu0 0.0
        %1213 = vmatpush1.msra.mxu0 0.0
        %1214 = vmatprep.subr.mxu0 0.0
        %1215 = vmatpush1.msra.mxu0 0.0
        %1216 = vmatprep.subr.mxu0 0.0
        %1217 = vmatpush1.msra.mxu0 0.0
        %1218 = vmatprep.mubr.f32.mxu0 0.0
        %1219 = vmatmul.mubr.f32.gmra.mrb[0].mxu0 %v1069
        %v1220 = vpop.f32.mrb[0].mxu0
        %v1221 = vadd.f32 0.0, %v1220
        %v1222 = vpop.f32.mrb[0].mxu0
        %1223 = vdwg.mxu0
        %v1224 = vadd.f32 %v1051, %v1150
        %v1225 = vadd.f32 %v1052, %v1152
        %v1226 = vadd.f32 %v1053, %v1221
        %v1227 = vld [vmem:[%s182] sm:$0xff]
        %v1228 = vld [vmem:[%s182 + $0x8] sm:$0x3]
        %v1229 = vunpack.c.l.bf16 %v1227
        %v1230 = vunpack.c.h.bf16 %v1227
        %v1231 = vunpack.c.l.bf16 %v1228
        %s1232 = scalar_lea.vmem %s1, 48
        %v1233 = vld [vmem:[%s1232] sm:$0xff]
        %v1237 = vcombine.high %v1229, %v1229
        %v1238 = vcombine.high %v1230, %v1230
        %1239 = vrot.lane.b32.xlu0 %v1229, 92
        %v1240 = vpop.permute.xlu0 %1239
        %1241 = vrot.lane.b32.xlu0 %v1237, 92
        %v1242 = vpop.permute.xlu0 %1241
        %1243 = vrot.lane.b32.xlu0 %v1230, 92
        %v1244 = vpop.permute.xlu0 %1243
        %1245 = vrot.lane.b32.xlu0 %v1238, 92
        %v1246 = vpop.permute.xlu0 %1245
        %1247 = vrot.lane.b32.xlu0 %v1231, 92
        %v1248 = vpop.permute.xlu0 %1247
        %vm1249 = vcmask 752640
        %v1250 = vsel %vm1249, %v1240, %v1242
        %v1251 = vsel %vm1249, %v1242, %v1244
        %v1252 = vsel %vm1249, %v1244, %v1246
        %v1253 = vsel %vm1249, %v1246, %v1248
        %v1255 = vsel %vm211, %v1233, 0
        %v1257 = vsel %vm215, %v1250, 0
        %v1259 = vsel %vm215, %v1251, 0
        %v1261 = vsel %vm215, %v1252, 0
        %v1263 = vsel %vm215, %v1253, 0
        %1265 = vmatprep.subr.mxu0 %v1259
        %1266 = vmatpush1.msra.mxu0 %v1257
        %1267 = vmatprep.subr.mxu0 0.0
        %1268 = vmatpush1.msra.mxu0 0.0
        %1269 = vmatprep.subr.mxu0 0.0
        %1270 = vmatpush1.msra.mxu0 0.0
        %1271 = vmatprep.subr.mxu0 0.0
        %1272 = vmatpush1.msra.mxu0 0.0
        %1273 = vmatprep.subr.mxu0 0.0
        %1274 = vmatpush1.msra.mxu0 0.0
        %1275 = vmatprep.subr.mxu0 0.0
        %1276 = vmatpush1.msra.mxu0 0.0
        %1277 = vmatprep.subr.mxu0 0.0
        %1278 = vmatpush1.msra.mxu0 0.0
        %1279 = vmatprep.subr.mxu0 0.0
        %1280 = vmatpush1.msra.mxu0 0.0
        %1281 = vmatprep.subr.mxu0 0.0
        %1282 = vmatpush1.msra.mxu0 0.0
        %1283 = vmatprep.subr.mxu0 0.0
        %1284 = vmatpush1.msra.mxu0 0.0
        %1285 = vmatprep.subr.mxu0 0.0
        %1286 = vmatpush1.msra.mxu0 0.0
        %1287 = vmatprep.subr.mxu0 0.0
        %1288 = vmatpush1.msra.mxu0 0.0
        %1289 = vmatprep.subr.mxu0 0.0
        %1290 = vmatpush1.msra.mxu0 0.0
        %1291 = vmatprep.subr.mxu0 0.0
        %1292 = vmatpush1.msra.mxu0 0.0
        %1293 = vmatprep.subr.mxu0 0.0
        %1294 = vmatpush1.msra.mxu0 0.0
        %1295 = vmatprep.subr.mxu0 0.0
        %1296 = vmatpush1.msra.mxu0 0.0
        %1297 = vmatprep.subr.mxu0 0.0
        %1298 = vmatpush1.msra.mxu0 0.0
        %1299 = vmatprep.subr.mxu0 0.0
        %1300 = vmatpush1.msra.mxu0 0.0
        %1301 = vmatprep.subr.mxu0 0.0
        %1302 = vmatpush1.msra.mxu0 0.0
        %1303 = vmatprep.subr.mxu0 0.0
        %1304 = vmatpush1.msra.mxu0 0.0
        %1305 = vmatprep.subr.mxu0 0.0
        %1306 = vmatpush1.msra.mxu0 0.0
        %1307 = vmatprep.subr.mxu0 0.0
        %1308 = vmatpush1.msra.mxu0 0.0
        %1309 = vmatprep.subr.mxu0 0.0
        %1310 = vmatpush1.msra.mxu0 0.0
        %1311 = vmatprep.subr.mxu0 0.0
        %1312 = vmatpush1.msra.mxu0 0.0
        %1313 = vmatprep.subr.mxu0 0.0
        %1314 = vmatpush1.msra.mxu0 0.0
        %1315 = vmatprep.subr.mxu0 0.0
        %1316 = vmatpush1.msra.mxu0 0.0
        %1317 = vmatprep.subr.mxu0 0.0
        %1318 = vmatpush1.msra.mxu0 0.0
        %1319 = vmatprep.subr.mxu0 0.0
        %1320 = vmatpush1.msra.mxu0 0.0
        %1321 = vmatprep.subr.mxu0 0.0
        %1322 = vmatpush1.msra.mxu0 0.0
        %1323 = vmatprep.subr.mxu0 0.0
        %1324 = vmatpush1.msra.mxu0 0.0
        %1325 = vmatprep.subr.mxu0 0.0
        %1326 = vmatpush1.msra.mxu0 0.0
        %1327 = vmatprep.subr.mxu0 0.0
        %1328 = vmatpush1.msra.mxu0 0.0
        %1329 = vmatprep.mubr.f32.mxu0 0.0
        %1330 = vmatmul.mubr.f32.gmra.mrb[0].mxu0 %v1255
        %v1331 = vpop.f32.mrb[0].mxu0
        %v1332 = vadd.f32 0.0, %v1331
        %v1333 = vpop.f32.mrb[0].mxu0
        %v1334 = vadd.f32 0.0, %v1333
        %1335 = vdwg.mxu0
        %1336 = vmatprep.subr.mxu0 %v1263
        %1337 = vmatpush1.msra.mxu0 %v1261
        %1338 = vmatprep.subr.mxu0 0.0
        %1339 = vmatpush1.msra.mxu0 0.0
        %1340 = vmatprep.subr.mxu0 0.0
        %1341 = vmatpush1.msra.mxu0 0.0
        %1342 = vmatprep.subr.mxu0 0.0
        %1343 = vmatpush1.msra.mxu0 0.0
        %1344 = vmatprep.subr.mxu0 0.0
        %1345 = vmatpush1.msra.mxu0 0.0
        %1346 = vmatprep.subr.mxu0 0.0
        %1347 = vmatpush1.msra.mxu0 0.0
        %1348 = vmatprep.subr.mxu0 0.0
        %1349 = vmatpush1.msra.mxu0 0.0
        %1350 = vmatprep.subr.mxu0 0.0
        %1351 = vmatpush1.msra.mxu0 0.0
        %1352 = vmatprep.subr.mxu0 0.0
        %1353 = vmatpush1.msra.mxu0 0.0
        %1354 = vmatprep.subr.mxu0 0.0
        %1355 = vmatpush1.msra.mxu0 0.0
        %1356 = vmatprep.subr.mxu0 0.0
        %1357 = vmatpush1.msra.mxu0 0.0
        %1358 = vmatprep.subr.mxu0 0.0
        %1359 = vmatpush1.msra.mxu0 0.0
        %1360 = vmatprep.subr.mxu0 0.0
        %1361 = vmatpush1.msra.mxu0 0.0
        %1362 = vmatprep.subr.mxu0 0.0
        %1363 = vmatpush1.msra.mxu0 0.0
        %1364 = vmatprep.subr.mxu0 0.0
        %1365 = vmatpush1.msra.mxu0 0.0
        %1366 = vmatprep.subr.mxu0 0.0
        %1367 = vmatpush1.msra.mxu0 0.0
        %1368 = vmatprep.subr.mxu0 0.0
        %1369 = vmatpush1.msra.mxu0 0.0
        %1370 = vmatprep.subr.mxu0 0.0
        %1371 = vmatpush1.msra.mxu0 0.0
        %1372 = vmatprep.subr.mxu0 0.0
        %1373 = vmatpush1.msra.mxu0 0.0
        %1374 = vmatprep.subr.mxu0 0.0
        %1375 = vmatpush1.msra.mxu0 0.0
        %1376 = vmatprep.subr.mxu0 0.0
        %1377 = vmatpush1.msra.mxu0 0.0
        %1378 = vmatprep.subr.mxu0 0.0
        %1379 = vmatpush1.msra.mxu0 0.0
        %1380 = vmatprep.subr.mxu0 0.0
        %1381 = vmatpush1.msra.mxu0 0.0
        %1382 = vmatprep.subr.mxu0 0.0
        %1383 = vmatpush1.msra.mxu0 0.0
        %1384 = vmatprep.subr.mxu0 0.0
        %1385 = vmatpush1.msra.mxu0 0.0
        %1386 = vmatprep.subr.mxu0 0.0
        %1387 = vmatpush1.msra.mxu0 0.0
        %1388 = vmatprep.subr.mxu0 0.0
        %1389 = vmatpush1.msra.mxu0 0.0
        %1390 = vmatprep.subr.mxu0 0.0
        %1391 = vmatpush1.msra.mxu0 0.0
        %1392 = vmatprep.subr.mxu0 0.0
        %1393 = vmatpush1.msra.mxu0 0.0
        %1394 = vmatprep.subr.mxu0 0.0
        %1395 = vmatpush1.msra.mxu0 0.0
        %1396 = vmatprep.subr.mxu0 0.0
        %1397 = vmatpush1.msra.mxu0 0.0
        %1398 = vmatprep.subr.mxu0 0.0
        %1399 = vmatpush1.msra.mxu0 0.0
        %1400 = vmatprep.mubr.f32.mxu0 0.0
        %1401 = vmatmul.mubr.f32.gmra.mrb[0].mxu0 %v1255
        %v1402 = vpop.f32.mrb[0].mxu0
        %v1403 = vadd.f32 0.0, %v1402
        %v1404 = vpop.f32.mrb[0].mxu0
        %1405 = vdwg.mxu0
        %v1406 = vadd.f32 %v1224, %v1332
        %v1407 = vadd.f32 %v1225, %v1334
        %v1408 = vadd.f32 %v1226, %v1403
        %1413 = vrot.lane.b32.xlu0 %v1250, 127
        %v1414 = vpop.permute.xlu0 %1413
        %1415 = vrot.lane.b32.xlu0 %v1251, 127
        %v1416 = vpop.permute.xlu0 %1415
        %1417 = vrot.lane.b32.xlu0 %v1252, 127
        %v1418 = vpop.permute.xlu0 %1417
        %1419 = vrot.lane.b32.xlu0 %v1253, 127
        %v1420 = vpop.permute.xlu0 %1419
        %v1421 = vsel %vm204, %v1418, %v1420
        %v1422 = vsel %vm204, %v1416, %v1418
        %v1423 = vsel %vm204, %v1414, %v1416
        %v1424 = vsel %vm204, %v1420, %v1414
        %s1425 = scalar_lea.vmem %s1, 56
        %v1426 = vld [vmem:[%s1425] sm:$0xff]
        %v1428 = vsel %vm211, %v1426, 0
        %v1431 = vsel %vm215, %v1423, 0
        %v1434 = vsel %vm215, %v1422, 0
        %v1437 = vsel %vm215, %v1421, 0
        %v1440 = vsel %vm215, %v1424, 0
        %1442 = vmatprep.subr.mxu0 %v1434
        %1443 = vmatpush1.msra.mxu0 %v1431
        %1444 = vmatprep.subr.mxu0 0.0
        %1445 = vmatpush1.msra.mxu0 0.0
        %1446 = vmatprep.subr.mxu0 0.0
        %1447 = vmatpush1.msra.mxu0 0.0
        %1448 = vmatprep.subr.mxu0 0.0
        %1449 = vmatpush1.msra.mxu0 0.0
        %1450 = vmatprep.subr.mxu0 0.0
        %1451 = vmatpush1.msra.mxu0 0.0
        %1452 = vmatprep.subr.mxu0 0.0
        %1453 = vmatpush1.msra.mxu0 0.0
        %1454 = vmatprep.subr.mxu0 0.0
        %1455 = vmatpush1.msra.mxu0 0.0
        %1456 = vmatprep.subr.mxu0 0.0
        %1457 = vmatpush1.msra.mxu0 0.0
        %1458 = vmatprep.subr.mxu0 0.0
        %1459 = vmatpush1.msra.mxu0 0.0
        %1460 = vmatprep.subr.mxu0 0.0
        %1461 = vmatpush1.msra.mxu0 0.0
        %1462 = vmatprep.subr.mxu0 0.0
        %1463 = vmatpush1.msra.mxu0 0.0
        %1464 = vmatprep.subr.mxu0 0.0
        %1465 = vmatpush1.msra.mxu0 0.0
        %1466 = vmatprep.subr.mxu0 0.0
        %1467 = vmatpush1.msra.mxu0 0.0
        %1468 = vmatprep.subr.mxu0 0.0
        %1469 = vmatpush1.msra.mxu0 0.0
        %1470 = vmatprep.subr.mxu0 0.0
        %1471 = vmatpush1.msra.mxu0 0.0
        %1472 = vmatprep.subr.mxu0 0.0
        %1473 = vmatpush1.msra.mxu0 0.0
        %1474 = vmatprep.subr.mxu0 0.0
        %1475 = vmatpush1.msra.mxu0 0.0
        %1476 = vmatprep.subr.mxu0 0.0
        %1477 = vmatpush1.msra.mxu0 0.0
        %1478 = vmatprep.subr.mxu0 0.0
        %1479 = vmatpush1.msra.mxu0 0.0
        %1480 = vmatprep.subr.mxu0 0.0
        %1481 = vmatpush1.msra.mxu0 0.0
        %1482 = vmatprep.subr.mxu0 0.0
        %1483 = vmatpush1.msra.mxu0 0.0
        %1484 = vmatprep.subr.mxu0 0.0
        %1485 = vmatpush1.msra.mxu0 0.0
        %1486 = vmatprep.subr.mxu0 0.0
        %1487 = vmatpush1.msra.mxu0 0.0
        %1488 = vmatprep.subr.mxu0 0.0
        %1489 = vmatpush1.msra.mxu0 0.0
        %1490 = vmatprep.subr.mxu0 0.0
        %1491 = vmatpush1.msra.mxu0 0.0
        %1492 = vmatprep.subr.mxu0 0.0
        %1493 = vmatpush1.msra.mxu0 0.0
        %1494 = vmatprep.subr.mxu0 0.0
        %1495 = vmatpush1.msra.mxu0 0.0
        %1496 = vmatprep.subr.mxu0 0.0
        %1497 = vmatpush1.msra.mxu0 0.0
        %1498 = vmatprep.subr.mxu0 0.0
        %1499 = vmatpush1.msra.mxu0 0.0
        %1500 = vmatprep.subr.mxu0 0.0
        %1501 = vmatpush1.msra.mxu0 0.0
        %1502 = vmatprep.subr.mxu0 0.0
        %1503 = vmatpush1.msra.mxu0 0.0
        %1504 = vmatprep.subr.mxu0 0.0
        %1505 = vmatpush1.msra.mxu0 0.0
        %1506 = vmatprep.mubr.f32.mxu0 0.0
        %1507 = vmatmul.mubr.f32.gmra.mrb[0].mxu0 %v1428
        %v1508 = vpop.f32.mrb[0].mxu0
        %v1509 = vadd.f32 0.0, %v1508
        %v1510 = vpop.f32.mrb[0].mxu0
        %v1511 = vadd.f32 0.0, %v1510
        %1512 = vdwg.mxu0
        %1513 = vmatprep.subr.mxu0 %v1440
        %1514 = vmatpush1.msra.mxu0 %v1437
        %1515 = vmatprep.subr.mxu0 0.0
        %1516 = vmatpush1.msra.mxu0 0.0
        %1517 = vmatprep.subr.mxu0 0.0
        %1518 = vmatpush1.msra.mxu0 0.0
        %1519 = vmatprep.subr.mxu0 0.0
        %1520 = vmatpush1.msra.mxu0 0.0
        %1521 = vmatprep.subr.mxu0 0.0
        %1522 = vmatpush1.msra.mxu0 0.0
        %1523 = vmatprep.subr.mxu0 0.0
        %1524 = vmatpush1.msra.mxu0 0.0
        %1525 = vmatprep.subr.mxu0 0.0
        %1526 = vmatpush1.msra.mxu0 0.0
        %1527 = vmatprep.subr.mxu0 0.0
        %1528 = vmatpush1.msra.mxu0 0.0
        %1529 = vmatprep.subr.mxu0 0.0
        %1530 = vmatpush1.msra.mxu0 0.0
        %1531 = vmatprep.subr.mxu0 0.0
        %1532 = vmatpush1.msra.mxu0 0.0
        %1533 = vmatprep.subr.mxu0 0.0
        %1534 = vmatpush1.msra.mxu0 0.0
        %1535 = vmatprep.subr.mxu0 0.0
        %1536 = vmatpush1.msra.mxu0 0.0
        %1537 = vmatprep.subr.mxu0 0.0
        %1538 = vmatpush1.msra.mxu0 0.0
        %1539 = vmatprep.subr.mxu0 0.0
        %1540 = vmatpush1.msra.mxu0 0.0
        %1541 = vmatprep.subr.mxu0 0.0
        %1542 = vmatpush1.msra.mxu0 0.0
        %1543 = vmatprep.subr.mxu0 0.0
        %1544 = vmatpush1.msra.mxu0 0.0
        %1545 = vmatprep.subr.mxu0 0.0
        %1546 = vmatpush1.msra.mxu0 0.0
        %1547 = vmatprep.subr.mxu0 0.0
        %1548 = vmatpush1.msra.mxu0 0.0
        %1549 = vmatprep.subr.mxu0 0.0
        %1550 = vmatpush1.msra.mxu0 0.0
        %1551 = vmatprep.subr.mxu0 0.0
        %1552 = vmatpush1.msra.mxu0 0.0
        %1553 = vmatprep.subr.mxu0 0.0
        %1554 = vmatpush1.msra.mxu0 0.0
        %1555 = vmatprep.subr.mxu0 0.0
        %1556 = vmatpush1.msra.mxu0 0.0
        %1557 = vmatprep.subr.mxu0 0.0
        %1558 = vmatpush1.msra.mxu0 0.0
        %1559 = vmatprep.subr.mxu0 0.0
        %1560 = vmatpush1.msra.mxu0 0.0
        %1561 = vmatprep.subr.mxu0 0.0
        %1562 = vmatpush1.msra.mxu0 0.0
        %1563 = vmatprep.subr.mxu0 0.0
        %1564 = vmatpush1.msra.mxu0 0.0
        %1565 = vmatprep.subr.mxu0 0.0
        %1566 = vmatpush1.msra.mxu0 0.0
        %1567 = vmatprep.subr.mxu0 0.0
        %1568 = vmatpush1.msra.mxu0 0.0
        %1569 = vmatprep.subr.mxu0 0.0
        %1570 = vmatpush1.msra.mxu0 0.0
        %1571 = vmatprep.subr.mxu0 0.0
        %1572 = vmatpush1.msra.mxu0 0.0
        %1573 = vmatprep.subr.mxu0 0.0
        %1574 = vmatpush1.msra.mxu0 0.0
        %1575 = vmatprep.subr.mxu0 0.0
        %1576 = vmatpush1.msra.mxu0 0.0
        %1577 = vmatprep.mubr.f32.mxu0 0.0
        %1578 = vmatmul.mubr.f32.gmra.mrb[0].mxu0 %v1428
        %v1579 = vpop.f32.mrb[0].mxu0
        %v1580 = vadd.f32 0.0, %v1579
        %v1581 = vpop.f32.mrb[0].mxu0
        %1582 = vdwg.mxu0
        %v1583 = vadd.f32 %v1406, %v1509
        %v1584 = vadd.f32 %v1407, %v1511
        %v1585 = vadd.f32 %v1408, %v1580
        %1586 = vrot.lane.b32.xlu0 %v1250, 126
        %v1587 = vpop.permute.xlu0 %1586
        %1588 = vrot.lane.b32.xlu0 %v1251, 126
        %v1589 = vpop.permute.xlu0 %1588
        %1590 = vrot.lane.b32.xlu0 %v1252, 126
        %v1591 = vpop.permute.xlu0 %1590
        %1592 = vrot.lane.b32.xlu0 %v1253, 126
        %v1593 = vpop.permute.xlu0 %1592
        %v1594 = vsel %vm529, %v1591, %v1593
        %v1595 = vsel %vm529, %v1589, %v1591
        %v1596 = vsel %vm529, %v1587, %v1589
        %v1597 = vsel %vm529, %v1593, %v1587
        %s1598 = scalar_lea.vmem %s1, 64
        %v1599 = vld [vmem:[%s1598] sm:$0xff]
        %v1601 = vsel %vm211, %v1599, 0
        %v1604 = vsel %vm215, %v1596, 0
        %v1607 = vsel %vm215, %v1595, 0
        %v1610 = vsel %vm215, %v1594, 0
        %v1613 = vsel %vm215, %v1597, 0
        %1615 = vmatprep.subr.mxu0 %v1607
        %1616 = vmatpush1.msra.mxu0 %v1604
        %1617 = vmatprep.subr.mxu0 0.0
        %1618 = vmatpush1.msra.mxu0 0.0
        %1619 = vmatprep.subr.mxu0 0.0
        %1620 = vmatpush1.msra.mxu0 0.0
        %1621 = vmatprep.subr.mxu0 0.0
        %1622 = vmatpush1.msra.mxu0 0.0
        %1623 = vmatprep.subr.mxu0 0.0
        %1624 = vmatpush1.msra.mxu0 0.0
        %1625 = vmatprep.subr.mxu0 0.0
        %1626 = vmatpush1.msra.mxu0 0.0
        %1627 = vmatprep.subr.mxu0 0.0
        %1628 = vmatpush1.msra.mxu0 0.0
        %1629 = vmatprep.subr.mxu0 0.0
        %1630 = vmatpush1.msra.mxu0 0.0
        %1631 = vmatprep.subr.mxu0 0.0
        %1632 = vmatpush1.msra.mxu0 0.0
        %1633 = vmatprep.subr.mxu0 0.0
        %1634 = vmatpush1.msra.mxu0 0.0
        %1635 = vmatprep.subr.mxu0 0.0
        %1636 = vmatpush1.msra.mxu0 0.0
        %1637 = vmatprep.subr.mxu0 0.0
        %1638 = vmatpush1.msra.mxu0 0.0
        %1639 = vmatprep.subr.mxu0 0.0
        %1640 = vmatpush1.msra.mxu0 0.0
        %1641 = vmatprep.subr.mxu0 0.0
        %1642 = vmatpush1.msra.mxu0 0.0
        %1643 = vmatprep.subr.mxu0 0.0
        %1644 = vmatpush1.msra.mxu0 0.0
        %1645 = vmatprep.subr.mxu0 0.0
        %1646 = vmatpush1.msra.mxu0 0.0
        %1647 = vmatprep.subr.mxu0 0.0
        %1648 = vmatpush1.msra.mxu0 0.0
        %1649 = vmatprep.subr.mxu0 0.0
        %1650 = vmatpush1.msra.mxu0 0.0
        %1651 = vmatprep.subr.mxu0 0.0
        %1652 = vmatpush1.msra.mxu0 0.0
        %1653 = vmatprep.subr.mxu0 0.0
        %1654 = vmatpush1.msra.mxu0 0.0
        %1655 = vmatprep.subr.mxu0 0.0
        %1656 = vmatpush1.msra.mxu0 0.0
        %1657 = vmatprep.subr.mxu0 0.0
        %1658 = vmatpush1.msra.mxu0 0.0
        %1659 = vmatprep.subr.mxu0 0.0
        %1660 = vmatpush1.msra.mxu0 0.0
        %1661 = vmatprep.subr.mxu0 0.0
        %1662 = vmatpush1.msra.mxu0 0.0
        %1663 = vmatprep.subr.mxu0 0.0
        %1664 = vmatpush1.msra.mxu0 0.0
        %1665 = vmatprep.subr.mxu0 0.0
        %1666 = vmatpush1.msra.mxu0 0.0
        %1667 = vmatprep.subr.mxu0 0.0
        %1668 = vmatpush1.msra.mxu0 0.0
        %1669 = vmatprep.subr.mxu0 0.0
        %1670 = vmatpush1.msra.mxu0 0.0
        %1671 = vmatprep.subr.mxu0 0.0
        %1672 = vmatpush1.msra.mxu0 0.0
        %1673 = vmatprep.subr.mxu0 0.0
        %1674 = vmatpush1.msra.mxu0 0.0
        %1675 = vmatprep.subr.mxu0 0.0
        %1676 = vmatpush1.msra.mxu0 0.0
        %1677 = vmatprep.subr.mxu0 0.0
        %1678 = vmatpush1.msra.mxu0 0.0
        %1679 = vmatprep.mubr.f32.mxu0 0.0
        %1680 = vmatmul.mubr.f32.gmra.mrb[0].mxu0 %v1601
        %v1681 = vpop.f32.mrb[0].mxu0
        %v1682 = vadd.f32 0.0, %v1681
        %v1683 = vpop.f32.mrb[0].mxu0
        %v1684 = vadd.f32 0.0, %v1683
        %1685 = vdwg.mxu0
        %1686 = vmatprep.subr.mxu0 %v1613
        %1687 = vmatpush1.msra.mxu0 %v1610
        %1688 = vmatprep.subr.mxu0 0.0
        %1689 = vmatpush1.msra.mxu0 0.0
        %1690 = vmatprep.subr.mxu0 0.0
        %1691 = vmatpush1.msra.mxu0 0.0
        %1692 = vmatprep.subr.mxu0 0.0
        %1693 = vmatpush1.msra.mxu0 0.0
        %1694 = vmatprep.subr.mxu0 0.0
        %1695 = vmatpush1.msra.mxu0 0.0
        %1696 = vmatprep.subr.mxu0 0.0
        %1697 = vmatpush1.msra.mxu0 0.0
        %1698 = vmatprep.subr.mxu0 0.0
        %1699 = vmatpush1.msra.mxu0 0.0
        %1700 = vmatprep.subr.mxu0 0.0
        %1701 = vmatpush1.msra.mxu0 0.0
        %1702 = vmatprep.subr.mxu0 0.0
        %1703 = vmatpush1.msra.mxu0 0.0
        %1704 = vmatprep.subr.mxu0 0.0
        %1705 = vmatpush1.msra.mxu0 0.0
        %1706 = vmatprep.subr.mxu0 0.0
        %1707 = vmatpush1.msra.mxu0 0.0
        %1708 = vmatprep.subr.mxu0 0.0
        %1709 = vmatpush1.msra.mxu0 0.0
        %1710 = vmatprep.subr.mxu0 0.0
        %1711 = vmatpush1.msra.mxu0 0.0
        %1712 = vmatprep.subr.mxu0 0.0
        %1713 = vmatpush1.msra.mxu0 0.0
        %1714 = vmatprep.subr.mxu0 0.0
        %1715 = vmatpush1.msra.mxu0 0.0
        %1716 = vmatprep.subr.mxu0 0.0
        %1717 = vmatpush1.msra.mxu0 0.0
        %1718 = vmatprep.subr.mxu0 0.0
        %1719 = vmatpush1.msra.mxu0 0.0
        %1720 = vmatprep.subr.mxu0 0.0
        %1721 = vmatpush1.msra.mxu0 0.0
        %1722 = vmatprep.subr.mxu0 0.0
        %1723 = vmatpush1.msra.mxu0 0.0
        %1724 = vmatprep.subr.mxu0 0.0
        %1725 = vmatpush1.msra.mxu0 0.0
        %1726 = vmatprep.subr.mxu0 0.0
        %1727 = vmatpush1.msra.mxu0 0.0
        %1728 = vmatprep.subr.mxu0 0.0
        %1729 = vmatpush1.msra.mxu0 0.0
        %1730 = vmatprep.subr.mxu0 0.0
        %1731 = vmatpush1.msra.mxu0 0.0
        %1732 = vmatprep.subr.mxu0 0.0
        %1733 = vmatpush1.msra.mxu0 0.0
        %1734 = vmatprep.subr.mxu0 0.0
        %1735 = vmatpush1.msra.mxu0 0.0
        %1736 = vmatprep.subr.mxu0 0.0
        %1737 = vmatpush1.msra.mxu0 0.0
        %1738 = vmatprep.subr.mxu0 0.0
        %1739 = vmatpush1.msra.mxu0 0.0
        %1740 = vmatprep.subr.mxu0 0.0
        %1741 = vmatpush1.msra.mxu0 0.0
        %1742 = vmatprep.subr.mxu0 0.0
        %1743 = vmatpush1.msra.mxu0 0.0
        %1744 = vmatprep.subr.mxu0 0.0
        %1745 = vmatpush1.msra.mxu0 0.0
        %1746 = vmatprep.subr.mxu0 0.0
        %1747 = vmatpush1.msra.mxu0 0.0
        %1748 = vmatprep.subr.mxu0 0.0
        %1749 = vmatpush1.msra.mxu0 0.0
        %1750 = vmatprep.mubr.f32.mxu0 0.0
        %1751 = vmatmul.mubr.f32.gmra.mrb[0].mxu0 %v1601
        %v1752 = vpop.f32.mrb[0].mxu0
        %v1753 = vadd.f32 0.0, %v1752
        %v1754 = vpop.f32.mrb[0].mxu0
        %1755 = vdwg.mxu0
        %v1756 = vadd.f32 %v1583, %v1682
        %v1757 = vadd.f32 %v1584, %v1684
        %v1758 = vadd.f32 %v1585, %v1753
        %v1759 = vld [vmem:[%s2] sm:$0xff]
        %1761 = vset.pattern.permute.xlu0 0
        %1762 = vperm.xlu0 %1761, %v1759
        %v1763 = vpop.permute.xlu0 %1762
        %v1765 = vadd.f32 %v1756, %v1763
        %v1766 = vadd.f32 %v1757, %v1763
        %v1767 = vadd.f32 %v1758, %v1763
        %v1768 = vmax.f32 %v1765, 0.0
        %v1769 = vmax.f32 %v1766, 0.0
        %v1770 = vmax.f32 %v1767, 0.0
        %1771 = vst [vmem:[%s177] sm:$0xff] %v1768
        %1772 = vst [vmem:[%s177 + $0x8] sm:$0xff] %v1769
        %1773 = vst [vmem:[%s177 + $0x10] sm:$0xff] %v1770
        %s1774 = sand.u32 %s107, 1
        %s1775 = scalar_lea.sflag [#allocation3], %s1774
        %s1776 = sand.u32 %s107, 1
        %s1777 = smul.addr %s1776, 24
        %s1778 = scalar_lea.vmem [#allocation2], %s1777
        // Predicated region
        $region33: #{tpu_custom_call.1} parent=31 // pred_check
          %p1779 = pneg %p117
        $region34: #{tpu_custom_call.1} parent=31 // pred_check_branch
          %1781 = sbr.rel (%p1779) target = $region36
        $region35: #{tpu_custom_call.1} parent=31 // pred_region
          %s1782 = smul.u32 3, %s22
          %s1784 = ssub.s32 384, 384
          %1785 = vsyncadd %s1775, %s1784
          %s1786 = smul.addr %s21, 3
          %s1787 = sadd.s32 %s1782, %s1786
          %s1788 = smul.addr %s1787, 128
          %s1789 = scalar_lea.hbm %s3, %s1788
          %s1791 = sshll.u32 %s1778, 4
          %s1792 = int_to_ptr.vmem [resolvable:$true] %s1791
          %1794 = dma.vmem_to_hbm [thread:$0]  %s1792, 384, %s1789, %s1775
        $region36: #{tpu_custom_call.1} parent=31 // pred_fallthru
          _
      $region32: #{tpu_custom_call.1} parent=5 // pred_fallthru
        _
      %p1795 = scmp.le.s32.totalorder 2, %s12
      // Predicated region
      $region37: #{tpu_custom_call.1} parent=5 // pred_check
        %p1796 = pneg %p1795
      $region38: #{tpu_custom_call.1} parent=5 // pred_check_branch
        %1798 = sbr.rel (%p1796) target = $region40
      $region39: #{tpu_custom_call.1} parent=5 // pred_region
        %s1799 = ssub.s32 %s12, 2
        // Predicated region
        $region41: #{tpu_custom_call.1} parent=39 // pred_check
          %p1800 = pneg %p123
        $region42: #{tpu_custom_call.1} parent=39 // pred_check_branch
          %1802 = sbr.rel (%p1800) target = $region44
        $region43: #{tpu_custom_call.1} parent=39 // pred_region
          %s1803 = sand.u32 %s108, 1
          %s1804 = scalar_lea.sflag [#allocation3], %s1803
          %s1805 = sand.u32 %s108, 1
          %s1806 = smul.addr %s1805, 24
          %s1807 = scalar_lea.vmem [#allocation2], %s1806
          %1808 = dma.done %s1804, 384
        $region44: #{tpu_custom_call.1} parent=39 // pred_fallthru
          _
      $region40: #{tpu_custom_call.1} parent=5 // pred_fallthru
        _
    $region6: #{tpu_custom_call.1} parent=1 // loop_footer
      %s16 = sadd.s32 1, %s12
    $region7: #{tpu_custom_call.1} parent=1 // loop_footer_branch
      %11 = sbr.rel target = $region3
    $region8: #{tpu_custom_call.1} parent=1 // loop_exit
      _
    %1809 = vsyncpa [#allocation3], 1
    %s1810 = scalar_lea.sflag [#allocation3], 1
    %1811 = vsyncpa %s1810, 1

</llo_original>
